<compile_context>
chip_gen: v5e
topology: v5e:2x2
jax: 0.10.0
libtpu: 0.0.40
codegen_flags: <defaults>
</compile_context>

<pallas_src>
import functools

import jax
import jax.numpy as jnp
from jax.experimental import pallas as pl
from jax.experimental.pallas import tpu as pltpu


def _block_kernel(x_ref, w_ref, b_ref, o_ref, *,
                  H, W, Cin, Cout, KH, KW, HP, WP, P):
    """Fused conv(valid,stride=1)+bias -> maxpool(P) -> ReLU for one batch tile.

    x_ref : (Bt, H, W, Cin)       NHWC input tile
    w_ref : (KH*KW*Cin, Cout)     im2col-flattened HWIO weights
    b_ref : (1, Cout)             bias
    o_ref : (Bt, HP, WP*Cout)     lane-dense pooled output slab
    """
    Bt = x_ref.shape[0]
    M = Bt * H * W

    # Layout-preserving flatten: (Bt, H, W, Cin) -> (Bt*H*W, Cin).
    x2d = x_ref[...].reshape(M, Cin)

    # im2col via static row rotations of the flattened image: the (kh, kw)
    # tap of output pixel r = b*H*W + h*W + w is x2d[r + kh*W + kw].  Rows
    # that wrap around only ever feed output positions the pooled output
    # never reads (h+kh < H and w+kw < W for every kept output pixel).
    cols = []
    for kh in range(KH):
        for kw in range(KW):
            s = kh * W + kw
            if s == 0:
                cols.append(x2d)
            else:
                cols.append(jnp.concatenate([x2d[s:, :], x2d[:s, :]], axis=0))
    patches = jnp.concatenate(cols, axis=1)                  # (M, KH*KW*Cin)

    # Single MXU matmul (f32 accumulation) + one hoisted bias add.
    conv = jnp.dot(patches, w_ref[...],
                   preferred_element_type=jnp.float32) + b_ref[...]

    # Back to (Bt, H, W, Cout); keep only rows that survive floor pooling.
    # (M, Cout) -> (Bt, H, W, Cout) is tile-aligned: W (=16) is a multiple
    # of the 8-sublane tile, so this reshape is a pure re-indexing.
    conv = conv.reshape(Bt, H, W, Cout)
    conv = conv[:, :HP * P, :, :]                            # leading-dim slice
    conv = conv.reshape(Bt, HP, P, W, Cout)                  # major-dim split

    # Max over the P rows of each pooling window (plain VPU maxes).
    hmax = conv[:, :, 0]
    for pi in range(1, P):
        hmax = jnp.maximum(hmax, conv[:, :, pi])             # (Bt, HP, W, Cout)

    # Max over the P columns of each window; assemble a lane-dense
    # (Bt, HP, WP*Cout) slab so the final store is one wide write.
    outcols = []
    for wp in range(WP):
        m = hmax[:, :, wp * P, :]
        for pj in range(1, P):
            m = jnp.maximum(m, hmax[:, :, wp * P + pj, :])
        outcols.append(m)                                    # (Bt, HP, Cout)
    pooled = jnp.concatenate(outcols, axis=-1)               # (Bt, HP, WP*Cout)

    o_ref[...] = jnp.maximum(pooled, 0.0).astype(o_ref.dtype)


@functools.partial(jax.jit, static_argnames=("pool_size", "batch_tile"))
def block_forward(x_nchw, weight_oihw, bias, pool_size, batch_tile=None):
    """Pallas version of Block.forward. Takes/returns PyTorch-style NCHW."""
    B, Cin, H, W = x_nchw.shape
    Cout, Cin2, KH, KW = weight_oihw.shape
    assert Cin == Cin2
    HO, WO = H - KH + 1, W - KW + 1              # valid conv output
    HP, WP = HO // pool_size, WO // pool_size    # pooled output (floor)
    assert HP > 0 and WP > 0

    if batch_tile is None:
        # Largest divisor of B whose per-step working set (input tile +
        # im2col patches + conv result, double-buffered by BlockSpec) stays
        # far below the scoped-VMEM limit; also safe for v7x's 64 MiB VMEM.
        per_image = H * W * (Cin + KH * KW * Cin + Cout) * 4
        cap = max(1, (4 << 20) // per_image)
        batch_tile = B
        while B % batch_tile or batch_tile > cap:
            batch_tile -= 1
    assert B % batch_tile == 0
    num_blocks = B // batch_tile

    # NOTE: in a real module these parameter transposes would be done once at
    # load time; under jit they are constant-foldable and the activation
    # transposes fuse into the surrounding program.
    x = jnp.transpose(x_nchw, (0, 2, 3, 1))                  # NCHW -> NHWC
    w = jnp.transpose(weight_oihw, (2, 3, 1, 0))             # OIHW -> HWIO
    w = w.reshape(KH * KW * Cin, Cout)                       # im2col weights
    b = bias.reshape(1, Cout)

    kernel = functools.partial(_block_kernel, H=H, W=W, Cin=Cin, Cout=Cout,
                               KH=KH, KW=KW, HP=HP, WP=WP, P=pool_size)

    out = pl.pallas_call(
        kernel,
        out_shape=jax.ShapeDtypeStruct((B, HP, WP * Cout), x.dtype),
        grid_spec=pltpu.PrefetchScalarGridSpec(
            num_scalar_prefetch=0,
            grid=(num_blocks,),
            in_specs=[
                pl.BlockSpec((batch_tile, H, W, Cin), lambda i: (i, 0, 0, 0)),
                pl.BlockSpec((KH * KW * Cin, Cout), lambda i: (0, 0)),
                pl.BlockSpec((1, Cout), lambda i: (0, 0)),
            ],
            out_specs=pl.BlockSpec((batch_tile, HP, WP * Cout),
                                   lambda i: (i, 0, 0)),
        ),
        compiler_params=pltpu.CompilerParams(
            dimension_semantics=("parallel",)),   # batch blocks are independent
    )(x, w, b)

    # (B, HP, WP*Cout) -> (B, HP, WP, Cout) -> NCHW
    return jnp.transpose(out.reshape(B, HP, WP, Cout), (0, 3, 1, 2))


def _reference(x_nchw, weight_oihw, bias, pool_size):
    """Pure-JAX reference matching torch semantics (for verification)."""
    conv = jax.lax.conv_general_dilated(
        x_nchw, weight_oihw, window_strides=(1, 1), padding="VALID",
        dimension_numbers=("NCHW", "OIHW", "NCHW"))
    conv = conv + bias[None, :, None, None]
    pooled = jax.lax.reduce_window(
        conv, -jnp.inf, jax.lax.max,
        window_dimensions=(1, 1, pool_size, pool_size),
        window_strides=(1, 1, pool_size, pool_size),
        padding="VALID")
    return jnp.maximum(pooled, 0.0)


if __name__ == "__main__":
    # Block(in_channels=4, num_filters=8, kernel_size=3, pool_size=2)
    B, Cin, H, W = 2, 4, 16, 16
    Cout, KH, KW, POOL = 8, 3, 3, 2

    key = jax.random.PRNGKey(0)
    kx, kw_, kb = jax.random.split(key, 3)
    x = jax.random.normal(kx, (B, Cin, H, W), jnp.float32)
    # Deterministic synthetic params (shapes match nn.Conv2d(4, 8, 3)).
    fan_in = Cin * KH * KW
    bound = 1.0 / (fan_in ** 0.5)
    weight = jax.random.uniform(kw_, (Cout, Cin, KH, KW), jnp.float32,
                                -bound, bound)
    bias = jax.random.uniform(kb, (Cout,), jnp.float32, -bound, bound)

    out = block_forward(x, weight, bias, pool_size=POOL)
    out = jax.block_until_ready(out)

    ref = jax.block_until_ready(_reference(x, weight, bias, POOL))
    assert out.shape == (B, Cout, (H - KH + 1) // POOL, (W - KW + 1) // POOL)
    assert jnp.allclose(out, ref, rtol=2e-3, atol=2e-3), (
        f"max abs err = {jnp.max(jnp.abs(out - ref))}")

    print("KERNEL_OK")
</pallas_src>

<mosaic_0001>
module attributes {stable_mosaic.version = 11 : i64} {
  func.func @_block_kernel(%arg0: i32, %arg1: memref<2x16x16x4xf32, #tpu.memory_space<vmem>>, %arg2: memref<36x8xf32, #tpu.memory_space<vmem>>, %arg3: memref<1x8xf32, #tpu.memory_space<vmem>>, %arg4: memref<2x7x56xf32, #tpu.memory_space<vmem>>) attributes {dimension_semantics = [#tpu.dimension_semantics<parallel>], iteration_bounds = array<i64: 1>, scalar_prefetch = 0 : i64, scratch_operands = 0 : i64, tpu.core_type = #tpu.core_type<tc>, window_params = [{transform_indices = @transform_0, window_bounds = array<i64: 2, 16, 16, 4>}, {pipeline_mode = #tpu.pipeline_mode<synchronous>, transform_indices = @transform_1, window_bounds = array<i64: 36, 8>}, {pipeline_mode = #tpu.pipeline_mode<synchronous>, transform_indices = @transform_2, window_bounds = array<i64: 1, 8>}, {transform_indices = @transform_3, window_bounds = array<i64: 2, 7, 56>}]} {
    %c0 = arith.constant 0 : index
    %c0_0 = arith.constant 0 : index
    %c0_1 = arith.constant 0 : index
    %c0_2 = arith.constant 0 : index
    %0 = vector.load %arg1[%c0, %c0_0, %c0_1, %c0_2] : memref<2x16x16x4xf32, #tpu.memory_space<vmem>>, vector<2x16x16x4xf32>
    %1 = vector.shape_cast %0 : vector<2x16x16x4xf32> to vector<512x4xf32>
    %2 = vector.extract_strided_slice %1 {offsets = [1, 0], sizes = [511, 4], strides = [1, 1]} : vector<512x4xf32> to vector<511x4xf32>
    %3 = vector.extract_strided_slice %1 {offsets = [0, 0], sizes = [1, 4], strides = [1, 1]} : vector<512x4xf32> to vector<1x4xf32>
    %4 = tpu.concatenate %2, %3 in 0 : vector<511x4xf32>, vector<1x4xf32> -> vector<512x4xf32>
    %5 = vector.extract_strided_slice %1 {offsets = [2, 0], sizes = [510, 4], strides = [1, 1]} : vector<512x4xf32> to vector<510x4xf32>
    %6 = vector.extract_strided_slice %1 {offsets = [0, 0], sizes = [2, 4], strides = [1, 1]} : vector<512x4xf32> to vector<2x4xf32>
    %7 = tpu.concatenate %5, %6 in 0 : vector<510x4xf32>, vector<2x4xf32> -> vector<512x4xf32>
    %8 = vector.extract_strided_slice %1 {offsets = [16, 0], sizes = [496, 4], strides = [1, 1]} : vector<512x4xf32> to vector<496x4xf32>
    %9 = vector.extract_strided_slice %1 {offsets = [0, 0], sizes = [16, 4], strides = [1, 1]} : vector<512x4xf32> to vector<16x4xf32>
    %10 = tpu.concatenate %8, %9 in 0 : vector<496x4xf32>, vector<16x4xf32> -> vector<512x4xf32>
    %11 = vector.extract_strided_slice %1 {offsets = [17, 0], sizes = [495, 4], strides = [1, 1]} : vector<512x4xf32> to vector<495x4xf32>
    %12 = vector.extract_strided_slice %1 {offsets = [0, 0], sizes = [17, 4], strides = [1, 1]} : vector<512x4xf32> to vector<17x4xf32>
    %13 = tpu.concatenate %11, %12 in 0 : vector<495x4xf32>, vector<17x4xf32> -> vector<512x4xf32>
    %14 = vector.extract_strided_slice %1 {offsets = [18, 0], sizes = [494, 4], strides = [1, 1]} : vector<512x4xf32> to vector<494x4xf32>
    %15 = vector.extract_strided_slice %1 {offsets = [0, 0], sizes = [18, 4], strides = [1, 1]} : vector<512x4xf32> to vector<18x4xf32>
    %16 = tpu.concatenate %14, %15 in 0 : vector<494x4xf32>, vector<18x4xf32> -> vector<512x4xf32>
    %17 = vector.extract_strided_slice %1 {offsets = [32, 0], sizes = [480, 4], strides = [1, 1]} : vector<512x4xf32> to vector<480x4xf32>
    %18 = vector.extract_strided_slice %1 {offsets = [0, 0], sizes = [32, 4], strides = [1, 1]} : vector<512x4xf32> to vector<32x4xf32>
    %19 = tpu.concatenate %17, %18 in 0 : vector<480x4xf32>, vector<32x4xf32> -> vector<512x4xf32>
    %20 = vector.extract_strided_slice %1 {offsets = [33, 0], sizes = [479, 4], strides = [1, 1]} : vector<512x4xf32> to vector<479x4xf32>
    %21 = vector.extract_strided_slice %1 {offsets = [0, 0], sizes = [33, 4], strides = [1, 1]} : vector<512x4xf32> to vector<33x4xf32>
    %22 = tpu.concatenate %20, %21 in 0 : vector<479x4xf32>, vector<33x4xf32> -> vector<512x4xf32>
    %23 = vector.extract_strided_slice %1 {offsets = [34, 0], sizes = [478, 4], strides = [1, 1]} : vector<512x4xf32> to vector<478x4xf32>
    %24 = vector.extract_strided_slice %1 {offsets = [0, 0], sizes = [34, 4], strides = [1, 1]} : vector<512x4xf32> to vector<34x4xf32>
    %25 = tpu.concatenate %23, %24 in 0 : vector<478x4xf32>, vector<34x4xf32> -> vector<512x4xf32>
    %26 = tpu.concatenate %1, %4, %7, %10, %13, %16, %19, %22, %25 in 1 : vector<512x4xf32>, vector<512x4xf32>, vector<512x4xf32>, vector<512x4xf32>, vector<512x4xf32>, vector<512x4xf32>, vector<512x4xf32>, vector<512x4xf32>, vector<512x4xf32> -> vector<512x36xf32>
    %c0_3 = arith.constant 0 : index
    %c0_4 = arith.constant 0 : index
    %27 = vector.load %arg2[%c0_3, %c0_4] : memref<36x8xf32, #tpu.memory_space<vmem>>, vector<36x8xf32>
    %cst = arith.constant dense<0.000000e+00> : vector<512x8xf32>
    %28 = tpu.matmul %26, %27, %cst {dimension_numbers = #tpu.dot_dimension_numbers<[1], [0], [0], [1], [0, 0, 1, 1], [], []>} : vector<512x36xf32>, vector<36x8xf32>, vector<512x8xf32> -> vector<512x8xf32>
    %c0_5 = arith.constant 0 : index
    %c0_6 = arith.constant 0 : index
    %29 = vector.load %arg3[%c0_5, %c0_6] : memref<1x8xf32, #tpu.memory_space<vmem>>, vector<1x8xf32>
    %30 = vector.broadcast %29 : vector<1x8xf32> to vector<512x8xf32>
    %31 = arith.addf %28, %30 : vector<512x8xf32>
    %32 = vector.shape_cast %31 : vector<512x8xf32> to vector<2x16x16x8xf32>
    %33 = vector.extract_strided_slice %32 {offsets = [0, 0, 0, 0], sizes = [2, 14, 16, 8], strides = [1, 1, 1, 1]} : vector<2x16x16x8xf32> to vector<2x14x16x8xf32>
    %34 = vector.shape_cast %33 : vector<2x14x16x8xf32> to vector<2x7x2x16x8xf32>
    %35 = vector.extract_strided_slice %34 {offsets = [0, 0, 0, 0, 0], sizes = [2, 7, 1, 16, 8], strides = [1, 1, 1, 1, 1]} : vector<2x7x2x16x8xf32> to vector<2x7x1x16x8xf32>
    %36 = vector.shape_cast %35 : vector<2x7x1x16x8xf32> to vector<2x7x16x8xf32>
    %37 = vector.extract_strided_slice %34 {offsets = [0, 0, 1, 0, 0], sizes = [2, 7, 1, 16, 8], strides = [1, 1, 1, 1, 1]} : vector<2x7x2x16x8xf32> to vector<2x7x1x16x8xf32>
    %38 = vector.shape_cast %37 : vector<2x7x1x16x8xf32> to vector<2x7x16x8xf32>
    %39 = arith.maximumf %36, %38 : vector<2x7x16x8xf32>
    %40 = vector.extract_strided_slice %39 {offsets = [0, 0, 0, 0], sizes = [2, 7, 1, 8], strides = [1, 1, 1, 1]} : vector<2x7x16x8xf32> to vector<2x7x1x8xf32>
    %41 = vector.shape_cast %40 : vector<2x7x1x8xf32> to vector<2x7x8xf32>
    %42 = vector.extract_strided_slice %39 {offsets = [0, 0, 1, 0], sizes = [2, 7, 1, 8], strides = [1, 1, 1, 1]} : vector<2x7x16x8xf32> to vector<2x7x1x8xf32>
    %43 = vector.shape_cast %42 : vector<2x7x1x8xf32> to vector<2x7x8xf32>
    %44 = arith.maximumf %41, %43 : vector<2x7x8xf32>
    %45 = vector.extract_strided_slice %39 {offsets = [0, 0, 2, 0], sizes = [2, 7, 1, 8], strides = [1, 1, 1, 1]} : vector<2x7x16x8xf32> to vector<2x7x1x8xf32>
    %46 = vector.shape_cast %45 : vector<2x7x1x8xf32> to vector<2x7x8xf32>
    %47 = vector.extract_strided_slice %39 {offsets = [0, 0, 3, 0], sizes = [2, 7, 1, 8], strides = [1, 1, 1, 1]} : vector<2x7x16x8xf32> to vector<2x7x1x8xf32>
    %48 = vector.shape_cast %47 : vector<2x7x1x8xf32> to vector<2x7x8xf32>
    %49 = arith.maximumf %46, %48 : vector<2x7x8xf32>
    %50 = vector.extract_strided_slice %39 {offsets = [0, 0, 4, 0], sizes = [2, 7, 1, 8], strides = [1, 1, 1, 1]} : vector<2x7x16x8xf32> to vector<2x7x1x8xf32>
    %51 = vector.shape_cast %50 : vector<2x7x1x8xf32> to vector<2x7x8xf32>
    %52 = vector.extract_strided_slice %39 {offsets = [0, 0, 5, 0], sizes = [2, 7, 1, 8], strides = [1, 1, 1, 1]} : vector<2x7x16x8xf32> to vector<2x7x1x8xf32>
    %53 = vector.shape_cast %52 : vector<2x7x1x8xf32> to vector<2x7x8xf32>
    %54 = arith.maximumf %51, %53 : vector<2x7x8xf32>
    %55 = vector.extract_strided_slice %39 {offsets = [0, 0, 6, 0], sizes = [2, 7, 1, 8], strides = [1, 1, 1, 1]} : vector<2x7x16x8xf32> to vector<2x7x1x8xf32>
    %56 = vector.shape_cast %55 : vector<2x7x1x8xf32> to vector<2x7x8xf32>
    %57 = vector.extract_strided_slice %39 {offsets = [0, 0, 7, 0], sizes = [2, 7, 1, 8], strides = [1, 1, 1, 1]} : vector<2x7x16x8xf32> to vector<2x7x1x8xf32>
    %58 = vector.shape_cast %57 : vector<2x7x1x8xf32> to vector<2x7x8xf32>
    %59 = arith.maximumf %56, %58 : vector<2x7x8xf32>
    %60 = vector.extract_strided_slice %39 {offsets = [0, 0, 8, 0], sizes = [2, 7, 1, 8], strides = [1, 1, 1, 1]} : vector<2x7x16x8xf32> to vector<2x7x1x8xf32>
    %61 = vector.shape_cast %60 : vector<2x7x1x8xf32> to vector<2x7x8xf32>
    %62 = vector.extract_strided_slice %39 {offsets = [0, 0, 9, 0], sizes = [2, 7, 1, 8], strides = [1, 1, 1, 1]} : vector<2x7x16x8xf32> to vector<2x7x1x8xf32>
    %63 = vector.shape_cast %62 : vector<2x7x1x8xf32> to vector<2x7x8xf32>
    %64 = arith.maximumf %61, %63 : vector<2x7x8xf32>
    %65 = vector.extract_strided_slice %39 {offsets = [0, 0, 10, 0], sizes = [2, 7, 1, 8], strides = [1, 1, 1, 1]} : vector<2x7x16x8xf32> to vector<2x7x1x8xf32>
    %66 = vector.shape_cast %65 : vector<2x7x1x8xf32> to vector<2x7x8xf32>
    %67 = vector.extract_strided_slice %39 {offsets = [0, 0, 11, 0], sizes = [2, 7, 1, 8], strides = [1, 1, 1, 1]} : vector<2x7x16x8xf32> to vector<2x7x1x8xf32>
    %68 = vector.shape_cast %67 : vector<2x7x1x8xf32> to vector<2x7x8xf32>
    %69 = arith.maximumf %66, %68 : vector<2x7x8xf32>
    %70 = vector.extract_strided_slice %39 {offsets = [0, 0, 12, 0], sizes = [2, 7, 1, 8], strides = [1, 1, 1, 1]} : vector<2x7x16x8xf32> to vector<2x7x1x8xf32>
    %71 = vector.shape_cast %70 : vector<2x7x1x8xf32> to vector<2x7x8xf32>
    %72 = vector.extract_strided_slice %39 {offsets = [0, 0, 13, 0], sizes = [2, 7, 1, 8], strides = [1, 1, 1, 1]} : vector<2x7x16x8xf32> to vector<2x7x1x8xf32>
    %73 = vector.shape_cast %72 : vector<2x7x1x8xf32> to vector<2x7x8xf32>
    %74 = arith.maximumf %71, %73 : vector<2x7x8xf32>
    %75 = tpu.concatenate %44, %49, %54, %59, %64, %69, %74 in 2 : vector<2x7x8xf32>, vector<2x7x8xf32>, vector<2x7x8xf32>, vector<2x7x8xf32>, vector<2x7x8xf32>, vector<2x7x8xf32>, vector<2x7x8xf32> -> vector<2x7x56xf32>
    %cst_7 = arith.constant 0.000000e+00 : f32
    %76 = vector.broadcast %cst_7 : f32 to vector<2x7x56xf32>
    %77 = arith.maximumf %75, %76 : vector<2x7x56xf32>
    %c0_8 = arith.constant 0 : index
    %c0_9 = arith.constant 0 : index
    %c0_10 = arith.constant 0 : index
    %78 = vector.load %arg4[%c0_8, %c0_9, %c0_10] : memref<2x7x56xf32, #tpu.memory_space<vmem>>, vector<2x7x56xf32>
    tpu.vector_store %arg4[%c0_8, %c0_9, %c0_10], %77 {strides = array<i32>} : memref<2x7x56xf32, #tpu.memory_space<vmem>>, vector<2x7x56xf32>,
    return
  }
  func.func @transform_0(%arg0: i32) -> (i32, i32, i32, i32) {
    %c0_i32 = arith.constant 0 : i32
    %c0_i32_0 = arith.constant 0 : i32
    %c0_i32_1 = arith.constant 0 : i32
    %c0_i32_2 = arith.constant 0 : i32
    return %arg0, %c0_i32, %c0_i32_0, %c0_i32_1 : i32, i32, i32, i32
  }
  func.func @transform_1(%arg0: i32) -> (i32, i32) {
    %c0_i32 = arith.constant 0 : i32
    %c0_i32_0 = arith.constant 0 : i32
    %c0_i32_1 = arith.constant 0 : i32
    return %c0_i32, %c0_i32_0 : i32, i32
  }
  func.func @transform_2(%arg0: i32) -> (i32, i32) {
    %c0_i32 = arith.constant 0 : i32
    %c0_i32_0 = arith.constant 0 : i32
    %c0_i32_1 = arith.constant 0 : i32
    return %c0_i32, %c0_i32_0 : i32, i32
  }
  func.func @transform_3(%arg0: i32) -> (i32, i32, i32) {
    %c0_i32 = arith.constant 0 : i32
    %c0_i32_0 = arith.constant 0 : i32
    %c0_i32_1 = arith.constant 0 : i32
    return %arg0, %c0_i32, %c0_i32_0 : i32, i32, i32
  }
}

</mosaic_0001>

<llo_original>
// kernel: block_forward.1
$region0: #{block_forward.1}
  #allocation0 [shape = 'u32[]', space=smem, size = 0x4, offset = 0x4, fixed_abs, tag = 'smem constant byte address 0x4 - core index']
  #allocation1 [shape = 'u32[72,128]{1,0:T(1,128)}', space=vmem, size = 0x9000, scoped, tag = 'internal scratch']
  %s0 = inlined_call_operand.vmem [shape: f32[2,16,16,4], index: 0, kind: input, shape index: {}]
  %s1 = inlined_call_operand.vmem [shape: f32[36,8], index: 1, kind: input, shape index: {}]
  %s2 = inlined_call_operand.vmem [shape: f32[1,8], index: 2, kind: input, shape index: {}]
  %s3 = inlined_call_operand.vmem [shape: f32[2,7,56], index: 3, kind: output, shape index: {}]
  %s4 = sld [smem:[#allocation0]]
  $region22: #{block_forward.1} parent=0
    _
  %s6 = ssub.s32 1, %s4
  %s7 = scalar_select 0, %s6, %s4
  // Predicated region
  $region2: #{block_forward.1} parent=0 // pred_check
    _
  $region3: #{block_forward.1} parent=0 // pred_check_branch
    %9 = sbr.rel (0) target = $region5
  $region4: #{block_forward.1} parent=0 // pred_region
    _
  $region5: #{block_forward.1} parent=0 // pred_fallthru
    _
  // Predicated region
  $region6: #{block_forward.1} parent=0 // pred_check
    _
  $region7: #{block_forward.1} parent=0 // pred_check_branch
    %11 = sbr.rel (0) target = $region9
  $region8: #{block_forward.1} parent=0 // pred_region
    _
  $region9: #{block_forward.1} parent=0 // pred_fallthru
    _
  // Predicated region
  $region10: #{block_forward.1} parent=0 // pred_check
    _
  $region11: #{block_forward.1} parent=0 // pred_check_branch
    %13 = sbr.rel (0) target = $region13
  $region12: #{block_forward.1} parent=0 // pred_region
    _
  $region13: #{block_forward.1} parent=0 // pred_fallthru
    _
  %v14 = vld [vmem:[%s0] sm:$0xff]
  %v15 = vld [vmem:[%s0 + $0x8] sm:$0xff]
  %v16 = vld [vmem:[%s0 + $0x10] sm:$0xff]
  %v17 = vld [vmem:[%s0 + $0x18] sm:$0xff]
  %v18 = vld [vmem:[%s0 + $0x20] sm:$0xff]
  %v19 = vld [vmem:[%s0 + $0x28] sm:$0xff]
  %v20 = vld [vmem:[%s0 + $0x30] sm:$0xff]
  %v21 = vld [vmem:[%s0 + $0x38] sm:$0xff]
  %v22 = vld [vmem:[%s0 + $0x40] sm:$0xff]
  %v23 = vld [vmem:[%s0 + $0x48] sm:$0xff]
  %v24 = vld [vmem:[%s0 + $0x50] sm:$0xff]
  %v25 = vld [vmem:[%s0 + $0x58] sm:$0xff]
  %v26 = vld [vmem:[%s0 + $0x60] sm:$0xff]
  %v27 = vld [vmem:[%s0 + $0x68] sm:$0xff]
  %v28 = vld [vmem:[%s0 + $0x70] sm:$0xff]
  %v29 = vld [vmem:[%s0 + $0x78] sm:$0xff]
  %v30 = vld [vmem:[%s0 + $0x80] sm:$0xff]
  %v31 = vld [vmem:[%s0 + $0x88] sm:$0xff]
  %v32 = vld [vmem:[%s0 + $0x90] sm:$0xff]
  %v33 = vld [vmem:[%s0 + $0x98] sm:$0xff]
  %v34 = vld [vmem:[%s0 + $0xa0] sm:$0xff]
  %v35 = vld [vmem:[%s0 + $0xa8] sm:$0xff]
  %v36 = vld [vmem:[%s0 + $0xb0] sm:$0xff]
  %v37 = vld [vmem:[%s0 + $0xb8] sm:$0xff]
  %v38 = vld [vmem:[%s0 + $0xc0] sm:$0xff]
  %v39 = vld [vmem:[%s0 + $0xc8] sm:$0xff]
  %v40 = vld [vmem:[%s0 + $0xd0] sm:$0xff]
  %v41 = vld [vmem:[%s0 + $0xd8] sm:$0xff]
  %v42 = vld [vmem:[%s0 + $0xe0] sm:$0xff]
  %v43 = vld [vmem:[%s0 + $0xe8] sm:$0xff]
  %v44 = vld [vmem:[%s0 + $0xf0] sm:$0xff]
  %v45 = vld [vmem:[%s0 + $0xf8] sm:$0xff]
  %v46 = vld [vmem:[%s0 + $0x100] sm:$0xff]
  %v47 = vld [vmem:[%s0 + $0x108] sm:$0xff]
  %v48 = vld [vmem:[%s0 + $0x110] sm:$0xff]
  %v49 = vld [vmem:[%s0 + $0x118] sm:$0xff]
  %v50 = vld [vmem:[%s0 + $0x120] sm:$0xff]
  %v51 = vld [vmem:[%s0 + $0x128] sm:$0xff]
  %v52 = vld [vmem:[%s0 + $0x130] sm:$0xff]
  %v53 = vld [vmem:[%s0 + $0x138] sm:$0xff]
  %v54 = vld [vmem:[%s0 + $0x140] sm:$0xff]
  %v55 = vld [vmem:[%s0 + $0x148] sm:$0xff]
  %v56 = vld [vmem:[%s0 + $0x150] sm:$0xff]
  %v57 = vld [vmem:[%s0 + $0x158] sm:$0xff]
  %v58 = vld [vmem:[%s0 + $0x160] sm:$0xff]
  %v59 = vld [vmem:[%s0 + $0x168] sm:$0xff]
  %v60 = vld [vmem:[%s0 + $0x170] sm:$0xff]
  %v61 = vld [vmem:[%s0 + $0x178] sm:$0xff]
  %v62 = vld [vmem:[%s0 + $0x180] sm:$0xff]
  %v63 = vld [vmem:[%s0 + $0x188] sm:$0xff]
  %v64 = vld [vmem:[%s0 + $0x190] sm:$0xff]
  %v65 = vld [vmem:[%s0 + $0x198] sm:$0xff]
  %v66 = vld [vmem:[%s0 + $0x1a0] sm:$0xff]
  %v67 = vld [vmem:[%s0 + $0x1a8] sm:$0xff]
  %v68 = vld [vmem:[%s0 + $0x1b0] sm:$0xff]
  %v69 = vld [vmem:[%s0 + $0x1b8] sm:$0xff]
  %v70 = vld [vmem:[%s0 + $0x1c0] sm:$0xff]
  %v71 = vld [vmem:[%s0 + $0x1c8] sm:$0xff]
  %v72 = vld [vmem:[%s0 + $0x1d0] sm:$0xff]
  %v73 = vld [vmem:[%s0 + $0x1d8] sm:$0xff]
  %v74 = vld [vmem:[%s0 + $0x1e0] sm:$0xff]
  %v75 = vld [vmem:[%s0 + $0x1e8] sm:$0xff]
  %v76 = vld [vmem:[%s0 + $0x1f0] sm:$0xff]
  %v77 = vld [vmem:[%s0 + $0x1f8] sm:$0xff]
  %vm142 = vcmask 1046528
  %v143 = vrot.slane %v14, 1
  %v144 = vrot.slane %v15, 1
  %v145 = vsel %vm142, %v143, %v144
  %v146 = vrot.slane %v16, 1
  %v147 = vsel %vm142, %v144, %v146
  %v148 = vrot.slane %v17, 1
  %v149 = vsel %vm142, %v146, %v148
  %v150 = vrot.slane %v18, 1
  %v151 = vsel %vm142, %v148, %v150
  %v152 = vrot.slane %v19, 1
  %v153 = vsel %vm142, %v150, %v152
  %v154 = vrot.slane %v20, 1
  %v155 = vsel %vm142, %v152, %v154
  %v156 = vrot.slane %v21, 1
  %v157 = vsel %vm142, %v154, %v156
  %v158 = vrot.slane %v22, 1
  %v159 = vsel %vm142, %v156, %v158
  %v160 = vrot.slane %v23, 1
  %v161 = vsel %vm142, %v158, %v160
  %v162 = vrot.slane %v24, 1
  %v163 = vsel %vm142, %v160, %v162
  %v164 = vrot.slane %v25, 1
  %v165 = vsel %vm142, %v162, %v164
  %v166 = vrot.slane %v26, 1
  %v167 = vsel %vm142, %v164, %v166
  %v168 = vrot.slane %v27, 1
  %v169 = vsel %vm142, %v166, %v168
  %v170 = vrot.slane %v28, 1
  %v171 = vsel %vm142, %v168, %v170
  %v172 = vrot.slane %v29, 1
  %v173 = vsel %vm142, %v170, %v172
  %v174 = vrot.slane %v30, 1
  %v175 = vsel %vm142, %v172, %v174
  %v176 = vrot.slane %v31, 1
  %v177 = vsel %vm142, %v174, %v176
  %v178 = vrot.slane %v32, 1
  %v179 = vsel %vm142, %v176, %v178
  %v180 = vrot.slane %v33, 1
  %v181 = vsel %vm142, %v178, %v180
  %v182 = vrot.slane %v34, 1
  %v183 = vsel %vm142, %v180, %v182
  %v184 = vrot.slane %v35, 1
  %v185 = vsel %vm142, %v182, %v184
  %v186 = vrot.slane %v36, 1
  %v187 = vsel %vm142, %v184, %v186
  %v188 = vrot.slane %v37, 1
  %v189 = vsel %vm142, %v186, %v188
  %v190 = vrot.slane %v38, 1
  %v191 = vsel %vm142, %v188, %v190
  %v192 = vrot.slane %v39, 1
  %v193 = vsel %vm142, %v190, %v192
  %v194 = vrot.slane %v40, 1
  %v195 = vsel %vm142, %v192, %v194
  %v196 = vrot.slane %v41, 1
  %v197 = vsel %vm142, %v194, %v196
  %v198 = vrot.slane %v42, 1
  %v199 = vsel %vm142, %v196, %v198
  %v200 = vrot.slane %v43, 1
  %v201 = vsel %vm142, %v198, %v200
  %v202 = vrot.slane %v44, 1
  %v203 = vsel %vm142, %v200, %v202
  %v204 = vrot.slane %v45, 1
  %v205 = vsel %vm142, %v202, %v204
  %v206 = vrot.slane %v46, 1
  %v207 = vsel %vm142, %v204, %v206
  %v208 = vrot.slane %v47, 1
  %v209 = vsel %vm142, %v206, %v208
  %v210 = vrot.slane %v48, 1
  %v211 = vsel %vm142, %v208, %v210
  %v212 = vrot.slane %v49, 1
  %v213 = vsel %vm142, %v210, %v212
  %v214 = vrot.slane %v50, 1
  %v215 = vsel %vm142, %v212, %v214
  %v216 = vrot.slane %v51, 1
  %v217 = vsel %vm142, %v214, %v216
  %v218 = vrot.slane %v52, 1
  %v219 = vsel %vm142, %v216, %v218
  %v220 = vrot.slane %v53, 1
  %v221 = vsel %vm142, %v218, %v220
  %v222 = vrot.slane %v54, 1
  %v223 = vsel %vm142, %v220, %v222
  %v224 = vrot.slane %v55, 1
  %v225 = vsel %vm142, %v222, %v224
  %v226 = vrot.slane %v56, 1
  %v227 = vsel %vm142, %v224, %v226
  %v228 = vrot.slane %v57, 1
  %v229 = vsel %vm142, %v226, %v228
  %v230 = vrot.slane %v58, 1
  %v231 = vsel %vm142, %v228, %v230
  %v232 = vrot.slane %v59, 1
  %v233 = vsel %vm142, %v230, %v232
  %v234 = vrot.slane %v60, 1
  %v235 = vsel %vm142, %v232, %v234
  %v236 = vrot.slane %v61, 1
  %v237 = vsel %vm142, %v234, %v236
  %v238 = vrot.slane %v62, 1
  %v239 = vsel %vm142, %v236, %v238
  %v240 = vrot.slane %v63, 1
  %v241 = vsel %vm142, %v238, %v240
  %v242 = vrot.slane %v64, 1
  %v243 = vsel %vm142, %v240, %v242
  %v244 = vrot.slane %v65, 1
  %v245 = vsel %vm142, %v242, %v244
  %v246 = vrot.slane %v66, 1
  %v247 = vsel %vm142, %v244, %v246
  %v248 = vrot.slane %v67, 1
  %v249 = vsel %vm142, %v246, %v248
  %v250 = vrot.slane %v68, 1
  %v251 = vsel %vm142, %v248, %v250
  %v252 = vrot.slane %v69, 1
  %v253 = vsel %vm142, %v250, %v252
  %v254 = vrot.slane %v70, 1
  %v255 = vsel %vm142, %v252, %v254
  %v256 = vrot.slane %v71, 1
  %v257 = vsel %vm142, %v254, %v256
  %v258 = vrot.slane %v72, 1
  %v259 = vsel %vm142, %v256, %v258
  %v260 = vrot.slane %v73, 1
  %v261 = vsel %vm142, %v258, %v260
  %v262 = vrot.slane %v74, 1
  %v263 = vsel %vm142, %v260, %v262
  %v264 = vrot.slane %v75, 1
  %v265 = vsel %vm142, %v262, %v264
  %v266 = vrot.slane %v76, 1
  %v267 = vsel %vm142, %v264, %v266
  %v268 = vrot.slane %v77, 1
  %v269 = vsel %vm142, %v266, %v268
  %v272 = vsel %vm142, %v268, %v143
  %vm273 = vcmask 1045504
  %v274 = vrot.slane %v14, 2
  %v275 = vrot.slane %v15, 2
  %v276 = vsel %vm273, %v274, %v275
  %v277 = vrot.slane %v16, 2
  %v278 = vsel %vm273, %v275, %v277
  %v279 = vrot.slane %v17, 2
  %v280 = vsel %vm273, %v277, %v279
  %v281 = vrot.slane %v18, 2
  %v282 = vsel %vm273, %v279, %v281
  %v283 = vrot.slane %v19, 2
  %v284 = vsel %vm273, %v281, %v283
  %v285 = vrot.slane %v20, 2
  %v286 = vsel %vm273, %v283, %v285
  %v287 = vrot.slane %v21, 2
  %v288 = vsel %vm273, %v285, %v287
  %v289 = vrot.slane %v22, 2
  %v290 = vsel %vm273, %v287, %v289
  %v291 = vrot.slane %v23, 2
  %v292 = vsel %vm273, %v289, %v291
  %v293 = vrot.slane %v24, 2
  %v294 = vsel %vm273, %v291, %v293
  %v295 = vrot.slane %v25, 2
  %v296 = vsel %vm273, %v293, %v295
  %v297 = vrot.slane %v26, 2
  %v298 = vsel %vm273, %v295, %v297
  %v299 = vrot.slane %v27, 2
  %v300 = vsel %vm273, %v297, %v299
  %v301 = vrot.slane %v28, 2
  %v302 = vsel %vm273, %v299, %v301
  %v303 = vrot.slane %v29, 2
  %v304 = vsel %vm273, %v301, %v303
  %v305 = vrot.slane %v30, 2
  %v306 = vsel %vm273, %v303, %v305
  %v307 = vrot.slane %v31, 2
  %v308 = vsel %vm273, %v305, %v307
  %v309 = vrot.slane %v32, 2
  %v310 = vsel %vm273, %v307, %v309
  %v311 = vrot.slane %v33, 2
  %v312 = vsel %vm273, %v309, %v311
  %v313 = vrot.slane %v34, 2
  %v314 = vsel %vm273, %v311, %v313
  %v315 = vrot.slane %v35, 2
  %v316 = vsel %vm273, %v313, %v315
  %v317 = vrot.slane %v36, 2
  %v318 = vsel %vm273, %v315, %v317
  %v319 = vrot.slane %v37, 2
  %v320 = vsel %vm273, %v317, %v319
  %v321 = vrot.slane %v38, 2
  %v322 = vsel %vm273, %v319, %v321
  %v323 = vrot.slane %v39, 2
  %v324 = vsel %vm273, %v321, %v323
  %v325 = vrot.slane %v40, 2
  %v326 = vsel %vm273, %v323, %v325
  %v327 = vrot.slane %v41, 2
  %v328 = vsel %vm273, %v325, %v327
  %v329 = vrot.slane %v42, 2
  %v330 = vsel %vm273, %v327, %v329
  %v331 = vrot.slane %v43, 2
  %v332 = vsel %vm273, %v329, %v331
  %v333 = vrot.slane %v44, 2
  %v334 = vsel %vm273, %v331, %v333
  %v335 = vrot.slane %v45, 2
  %v336 = vsel %vm273, %v333, %v335
  %v337 = vrot.slane %v46, 2
  %v338 = vsel %vm273, %v335, %v337
  %v339 = vrot.slane %v47, 2
  %v340 = vsel %vm273, %v337, %v339
  %v341 = vrot.slane %v48, 2
  %v342 = vsel %vm273, %v339, %v341
  %v343 = vrot.slane %v49, 2
  %v344 = vsel %vm273, %v341, %v343
  %v345 = vrot.slane %v50, 2
  %v346 = vsel %vm273, %v343, %v345
  %v347 = vrot.slane %v51, 2
  %v348 = vsel %vm273, %v345, %v347
  %v349 = vrot.slane %v52, 2
  %v350 = vsel %vm273, %v347, %v349
  %v351 = vrot.slane %v53, 2
  %v352 = vsel %vm273, %v349, %v351
  %v353 = vrot.slane %v54, 2
  %v354 = vsel %vm273, %v351, %v353
  %v355 = vrot.slane %v55, 2
  %v356 = vsel %vm273, %v353, %v355
  %v357 = vrot.slane %v56, 2
  %v358 = vsel %vm273, %v355, %v357
  %v359 = vrot.slane %v57, 2
  %v360 = vsel %vm273, %v357, %v359
  %v361 = vrot.slane %v58, 2
  %v362 = vsel %vm273, %v359, %v361
  %v363 = vrot.slane %v59, 2
  %v364 = vsel %vm273, %v361, %v363
  %v365 = vrot.slane %v60, 2
  %v366 = vsel %vm273, %v363, %v365
  %v367 = vrot.slane %v61, 2
  %v368 = vsel %vm273, %v365, %v367
  %v369 = vrot.slane %v62, 2
  %v370 = vsel %vm273, %v367, %v369
  %v371 = vrot.slane %v63, 2
  %v372 = vsel %vm273, %v369, %v371
  %v373 = vrot.slane %v64, 2
  %v374 = vsel %vm273, %v371, %v373
  %v375 = vrot.slane %v65, 2
  %v376 = vsel %vm273, %v373, %v375
  %v377 = vrot.slane %v66, 2
  %v378 = vsel %vm273, %v375, %v377
  %v379 = vrot.slane %v67, 2
  %v380 = vsel %vm273, %v377, %v379
  %v381 = vrot.slane %v68, 2
  %v382 = vsel %vm273, %v379, %v381
  %v383 = vrot.slane %v69, 2
  %v384 = vsel %vm273, %v381, %v383
  %v385 = vrot.slane %v70, 2
  %v386 = vsel %vm273, %v383, %v385
  %v387 = vrot.slane %v71, 2
  %v388 = vsel %vm273, %v385, %v387
  %v389 = vrot.slane %v72, 2
  %v390 = vsel %vm273, %v387, %v389
  %v391 = vrot.slane %v73, 2
  %v392 = vsel %vm273, %v389, %v391
  %v393 = vrot.slane %v74, 2
  %v394 = vsel %vm273, %v391, %v393
  %v395 = vrot.slane %v75, 2
  %v396 = vsel %vm273, %v393, %v395
  %v397 = vrot.slane %v76, 2
  %v398 = vsel %vm273, %v395, %v397
  %v399 = vrot.slane %v77, 2
  %v400 = vsel %vm273, %v397, %v399
  %v403 = vsel %vm273, %v399, %v274
  %405 = vrot.lane.b32.xlu0 %v145, 4
  %v406 = vpop.permute.xlu0 %405
  %407 = vrot.lane.b32.xlu0 %v147, 4
  %v408 = vpop.permute.xlu0 %407
  %409 = vrot.lane.b32.xlu0 %v149, 4
  %v410 = vpop.permute.xlu0 %409
  %411 = vrot.lane.b32.xlu0 %v151, 4
  %v412 = vpop.permute.xlu0 %411
  %413 = vrot.lane.b32.xlu0 %v153, 4
  %v414 = vpop.permute.xlu0 %413
  %415 = vrot.lane.b32.xlu0 %v155, 4
  %v416 = vpop.permute.xlu0 %415
  %417 = vrot.lane.b32.xlu0 %v157, 4
  %v418 = vpop.permute.xlu0 %417
  %419 = vrot.lane.b32.xlu0 %v159, 4
  %v420 = vpop.permute.xlu0 %419
  %421 = vrot.lane.b32.xlu0 %v161, 4
  %v422 = vpop.permute.xlu0 %421
  %423 = vrot.lane.b32.xlu0 %v163, 4
  %v424 = vpop.permute.xlu0 %423
  %425 = vrot.lane.b32.xlu0 %v165, 4
  %v426 = vpop.permute.xlu0 %425
  %427 = vrot.lane.b32.xlu0 %v167, 4
  %v428 = vpop.permute.xlu0 %427
  %429 = vrot.lane.b32.xlu0 %v169, 4
  %v430 = vpop.permute.xlu0 %429
  %431 = vrot.lane.b32.xlu0 %v171, 4
  %v432 = vpop.permute.xlu0 %431
  %433 = vrot.lane.b32.xlu0 %v173, 4
  %v434 = vpop.permute.xlu0 %433
  %435 = vrot.lane.b32.xlu0 %v175, 4
  %v436 = vpop.permute.xlu0 %435
  %437 = vrot.lane.b32.xlu0 %v177, 4
  %v438 = vpop.permute.xlu0 %437
  %439 = vrot.lane.b32.xlu0 %v179, 4
  %v440 = vpop.permute.xlu0 %439
  %441 = vrot.lane.b32.xlu0 %v181, 4
  %v442 = vpop.permute.xlu0 %441
  %443 = vrot.lane.b32.xlu0 %v183, 4
  %v444 = vpop.permute.xlu0 %443
  %445 = vrot.lane.b32.xlu0 %v185, 4
  %v446 = vpop.permute.xlu0 %445
  %447 = vrot.lane.b32.xlu0 %v187, 4
  %v448 = vpop.permute.xlu0 %447
  %449 = vrot.lane.b32.xlu0 %v189, 4
  %v450 = vpop.permute.xlu0 %449
  %451 = vrot.lane.b32.xlu0 %v191, 4
  %v452 = vpop.permute.xlu0 %451
  %453 = vrot.lane.b32.xlu0 %v193, 4
  %v454 = vpop.permute.xlu0 %453
  %455 = vrot.lane.b32.xlu0 %v195, 4
  %v456 = vpop.permute.xlu0 %455
  %457 = vrot.lane.b32.xlu0 %v197, 4
  %v458 = vpop.permute.xlu0 %457
  %459 = vrot.lane.b32.xlu0 %v199, 4
  %v460 = vpop.permute.xlu0 %459
  %461 = vrot.lane.b32.xlu0 %v201, 4
  %v462 = vpop.permute.xlu0 %461
  %463 = vrot.lane.b32.xlu0 %v203, 4
  %v464 = vpop.permute.xlu0 %463
  %465 = vrot.lane.b32.xlu0 %v205, 4
  %v466 = vpop.permute.xlu0 %465
  %467 = vrot.lane.b32.xlu0 %v207, 4
  %v468 = vpop.permute.xlu0 %467
  %469 = vrot.lane.b32.xlu0 %v209, 4
  %v470 = vpop.permute.xlu0 %469
  %471 = vrot.lane.b32.xlu0 %v211, 4
  %v472 = vpop.permute.xlu0 %471
  %473 = vrot.lane.b32.xlu0 %v213, 4
  %v474 = vpop.permute.xlu0 %473
  %475 = vrot.lane.b32.xlu0 %v215, 4
  %v476 = vpop.permute.xlu0 %475
  %477 = vrot.lane.b32.xlu0 %v217, 4
  %v478 = vpop.permute.xlu0 %477
  %479 = vrot.lane.b32.xlu0 %v219, 4
  %v480 = vpop.permute.xlu0 %479
  %481 = vrot.lane.b32.xlu0 %v221, 4
  %v482 = vpop.permute.xlu0 %481
  %483 = vrot.lane.b32.xlu0 %v223, 4
  %v484 = vpop.permute.xlu0 %483
  %485 = vrot.lane.b32.xlu0 %v225, 4
  %v486 = vpop.permute.xlu0 %485
  %487 = vrot.lane.b32.xlu0 %v227, 4
  %v488 = vpop.permute.xlu0 %487
  %489 = vrot.lane.b32.xlu0 %v229, 4
  %v490 = vpop.permute.xlu0 %489
  %491 = vrot.lane.b32.xlu0 %v231, 4
  %v492 = vpop.permute.xlu0 %491
  %493 = vrot.lane.b32.xlu0 %v233, 4
  %v494 = vpop.permute.xlu0 %493
  %495 = vrot.lane.b32.xlu0 %v235, 4
  %v496 = vpop.permute.xlu0 %495
  %497 = vrot.lane.b32.xlu0 %v237, 4
  %v498 = vpop.permute.xlu0 %497
  %499 = vrot.lane.b32.xlu0 %v239, 4
  %v500 = vpop.permute.xlu0 %499
  %501 = vrot.lane.b32.xlu0 %v241, 4
  %v502 = vpop.permute.xlu0 %501
  %503 = vrot.lane.b32.xlu0 %v243, 4
  %v504 = vpop.permute.xlu0 %503
  %505 = vrot.lane.b32.xlu0 %v245, 4
  %v506 = vpop.permute.xlu0 %505
  %507 = vrot.lane.b32.xlu0 %v247, 4
  %v508 = vpop.permute.xlu0 %507
  %509 = vrot.lane.b32.xlu0 %v249, 4
  %v510 = vpop.permute.xlu0 %509
  %511 = vrot.lane.b32.xlu0 %v251, 4
  %v512 = vpop.permute.xlu0 %511
  %513 = vrot.lane.b32.xlu0 %v253, 4
  %v514 = vpop.permute.xlu0 %513
  %515 = vrot.lane.b32.xlu0 %v255, 4
  %v516 = vpop.permute.xlu0 %515
  %517 = vrot.lane.b32.xlu0 %v257, 4
  %v518 = vpop.permute.xlu0 %517
  %519 = vrot.lane.b32.xlu0 %v259, 4
  %v520 = vpop.permute.xlu0 %519
  %521 = vrot.lane.b32.xlu0 %v261, 4
  %v522 = vpop.permute.xlu0 %521
  %523 = vrot.lane.b32.xlu0 %v263, 4
  %v524 = vpop.permute.xlu0 %523
  %525 = vrot.lane.b32.xlu0 %v265, 4
  %v526 = vpop.permute.xlu0 %525
  %527 = vrot.lane.b32.xlu0 %v267, 4
  %v528 = vpop.permute.xlu0 %527
  %529 = vrot.lane.b32.xlu0 %v269, 4
  %v530 = vpop.permute.xlu0 %529
  %531 = vrot.lane.b32.xlu0 %v272, 4
  %v532 = vpop.permute.xlu0 %531
  %598 = vrot.lane.b32.xlu0 %v276, 8
  %v599 = vpop.permute.xlu0 %598
  %600 = vrot.lane.b32.xlu0 %v278, 8
  %v601 = vpop.permute.xlu0 %600
  %602 = vrot.lane.b32.xlu0 %v280, 8
  %v603 = vpop.permute.xlu0 %602
  %604 = vrot.lane.b32.xlu0 %v282, 8
  %v605 = vpop.permute.xlu0 %604
  %606 = vrot.lane.b32.xlu0 %v284, 8
  %v607 = vpop.permute.xlu0 %606
  %608 = vrot.lane.b32.xlu0 %v286, 8
  %v609 = vpop.permute.xlu0 %608
  %610 = vrot.lane.b32.xlu0 %v288, 8
  %v611 = vpop.permute.xlu0 %610
  %612 = vrot.lane.b32.xlu0 %v290, 8
  %v613 = vpop.permute.xlu0 %612
  %614 = vrot.lane.b32.xlu0 %v292, 8
  %v615 = vpop.permute.xlu0 %614
  %616 = vrot.lane.b32.xlu0 %v294, 8
  %v617 = vpop.permute.xlu0 %616
  %618 = vrot.lane.b32.xlu0 %v296, 8
  %v619 = vpop.permute.xlu0 %618
  %620 = vrot.lane.b32.xlu0 %v298, 8
  %v621 = vpop.permute.xlu0 %620
  %622 = vrot.lane.b32.xlu0 %v300, 8
  %v623 = vpop.permute.xlu0 %622
  %624 = vrot.lane.b32.xlu0 %v302, 8
  %v625 = vpop.permute.xlu0 %624
  %626 = vrot.lane.b32.xlu0 %v304, 8
  %v627 = vpop.permute.xlu0 %626
  %628 = vrot.lane.b32.xlu0 %v306, 8
  %v629 = vpop.permute.xlu0 %628
  %630 = vrot.lane.b32.xlu0 %v308, 8
  %v631 = vpop.permute.xlu0 %630
  %632 = vrot.lane.b32.xlu0 %v310, 8
  %v633 = vpop.permute.xlu0 %632
  %634 = vrot.lane.b32.xlu0 %v312, 8
  %v635 = vpop.permute.xlu0 %634
  %636 = vrot.lane.b32.xlu0 %v314, 8
  %v637 = vpop.permute.xlu0 %636
  %638 = vrot.lane.b32.xlu0 %v316, 8
  %v639 = vpop.permute.xlu0 %638
  %640 = vrot.lane.b32.xlu0 %v318, 8
  %v641 = vpop.permute.xlu0 %640
  %642 = vrot.lane.b32.xlu0 %v320, 8
  %v643 = vpop.permute.xlu0 %642
  %644 = vrot.lane.b32.xlu0 %v322, 8
  %v645 = vpop.permute.xlu0 %644
  %646 = vrot.lane.b32.xlu0 %v324, 8
  %v647 = vpop.permute.xlu0 %646
  %648 = vrot.lane.b32.xlu0 %v326, 8
  %v649 = vpop.permute.xlu0 %648
  %650 = vrot.lane.b32.xlu0 %v328, 8
  %v651 = vpop.permute.xlu0 %650
  %652 = vrot.lane.b32.xlu0 %v330, 8
  %v653 = vpop.permute.xlu0 %652
  %654 = vrot.lane.b32.xlu0 %v332, 8
  %v655 = vpop.permute.xlu0 %654
  %656 = vrot.lane.b32.xlu0 %v334, 8
  %v657 = vpop.permute.xlu0 %656
  %658 = vrot.lane.b32.xlu0 %v336, 8
  %v659 = vpop.permute.xlu0 %658
  %660 = vrot.lane.b32.xlu0 %v338, 8
  %v661 = vpop.permute.xlu0 %660
  %662 = vrot.lane.b32.xlu0 %v340, 8
  %v663 = vpop.permute.xlu0 %662
  %664 = vrot.lane.b32.xlu0 %v342, 8
  %v665 = vpop.permute.xlu0 %664
  %666 = vrot.lane.b32.xlu0 %v344, 8
  %v667 = vpop.permute.xlu0 %666
  %668 = vrot.lane.b32.xlu0 %v346, 8
  %v669 = vpop.permute.xlu0 %668
  %670 = vrot.lane.b32.xlu0 %v348, 8
  %v671 = vpop.permute.xlu0 %670
  %672 = vrot.lane.b32.xlu0 %v350, 8
  %v673 = vpop.permute.xlu0 %672
  %674 = vrot.lane.b32.xlu0 %v352, 8
  %v675 = vpop.permute.xlu0 %674
  %676 = vrot.lane.b32.xlu0 %v354, 8
  %v677 = vpop.permute.xlu0 %676
  %678 = vrot.lane.b32.xlu0 %v356, 8
  %v679 = vpop.permute.xlu0 %678
  %680 = vrot.lane.b32.xlu0 %v358, 8
  %v681 = vpop.permute.xlu0 %680
  %682 = vrot.lane.b32.xlu0 %v360, 8
  %v683 = vpop.permute.xlu0 %682
  %684 = vrot.lane.b32.xlu0 %v362, 8
  %v685 = vpop.permute.xlu0 %684
  %686 = vrot.lane.b32.xlu0 %v364, 8
  %v687 = vpop.permute.xlu0 %686
  %688 = vrot.lane.b32.xlu0 %v366, 8
  %v689 = vpop.permute.xlu0 %688
  %690 = vrot.lane.b32.xlu0 %v368, 8
  %v691 = vpop.permute.xlu0 %690
  %692 = vrot.lane.b32.xlu0 %v370, 8
  %v693 = vpop.permute.xlu0 %692
  %694 = vrot.lane.b32.xlu0 %v372, 8
  %v695 = vpop.permute.xlu0 %694
  %696 = vrot.lane.b32.xlu0 %v374, 8
  %v697 = vpop.permute.xlu0 %696
  %698 = vrot.lane.b32.xlu0 %v376, 8
  %v699 = vpop.permute.xlu0 %698
  %700 = vrot.lane.b32.xlu0 %v378, 8
  %v701 = vpop.permute.xlu0 %700
  %702 = vrot.lane.b32.xlu0 %v380, 8
  %v703 = vpop.permute.xlu0 %702
  %704 = vrot.lane.b32.xlu0 %v382, 8
  %v705 = vpop.permute.xlu0 %704
  %706 = vrot.lane.b32.xlu0 %v384, 8
  %v707 = vpop.permute.xlu0 %706
  %708 = vrot.lane.b32.xlu0 %v386, 8
  %v709 = vpop.permute.xlu0 %708
  %710 = vrot.lane.b32.xlu0 %v388, 8
  %v711 = vpop.permute.xlu0 %710
  %712 = vrot.lane.b32.xlu0 %v390, 8
  %v713 = vpop.permute.xlu0 %712
  %714 = vrot.lane.b32.xlu0 %v392, 8
  %v715 = vpop.permute.xlu0 %714
  %716 = vrot.lane.b32.xlu0 %v394, 8
  %v717 = vpop.permute.xlu0 %716
  %718 = vrot.lane.b32.xlu0 %v396, 8
  %v719 = vpop.permute.xlu0 %718
  %720 = vrot.lane.b32.xlu0 %v398, 8
  %v721 = vpop.permute.xlu0 %720
  %722 = vrot.lane.b32.xlu0 %v400, 8
  %v723 = vpop.permute.xlu0 %722
  %724 = vrot.lane.b32.xlu0 %v403, 8
  %v725 = vpop.permute.xlu0 %724
  %790 = vrot.lane.b32.xlu0 %v16, 12
  %v791 = vpop.permute.xlu0 %790
  %792 = vrot.lane.b32.xlu0 %v17, 12
  %v793 = vpop.permute.xlu0 %792
  %794 = vrot.lane.b32.xlu0 %v18, 12
  %v795 = vpop.permute.xlu0 %794
  %796 = vrot.lane.b32.xlu0 %v19, 12
  %v797 = vpop.permute.xlu0 %796
  %798 = vrot.lane.b32.xlu0 %v20, 12
  %v799 = vpop.permute.xlu0 %798
  %800 = vrot.lane.b32.xlu0 %v21, 12
  %v801 = vpop.permute.xlu0 %800
  %802 = vrot.lane.b32.xlu0 %v22, 12
  %v803 = vpop.permute.xlu0 %802
  %804 = vrot.lane.b32.xlu0 %v23, 12
  %v805 = vpop.permute.xlu0 %804
  %806 = vrot.lane.b32.xlu0 %v24, 12
  %v807 = vpop.permute.xlu0 %806
  %808 = vrot.lane.b32.xlu0 %v25, 12
  %v809 = vpop.permute.xlu0 %808
  %810 = vrot.lane.b32.xlu0 %v26, 12
  %v811 = vpop.permute.xlu0 %810
  %812 = vrot.lane.b32.xlu0 %v27, 12
  %v813 = vpop.permute.xlu0 %812
  %814 = vrot.lane.b32.xlu0 %v28, 12
  %v815 = vpop.permute.xlu0 %814
  %816 = vrot.lane.b32.xlu0 %v29, 12
  %v817 = vpop.permute.xlu0 %816
  %818 = vrot.lane.b32.xlu0 %v30, 12
  %v819 = vpop.permute.xlu0 %818
  %820 = vrot.lane.b32.xlu0 %v31, 12
  %v821 = vpop.permute.xlu0 %820
  %822 = vrot.lane.b32.xlu0 %v32, 12
  %v823 = vpop.permute.xlu0 %822
  %824 = vrot.lane.b32.xlu0 %v33, 12
  %v825 = vpop.permute.xlu0 %824
  %826 = vrot.lane.b32.xlu0 %v34, 12
  %v827 = vpop.permute.xlu0 %826
  %828 = vrot.lane.b32.xlu0 %v35, 12
  %v829 = vpop.permute.xlu0 %828
  %830 = vrot.lane.b32.xlu0 %v36, 12
  %v831 = vpop.permute.xlu0 %830
  %832 = vrot.lane.b32.xlu0 %v37, 12
  %v833 = vpop.permute.xlu0 %832
  %834 = vrot.lane.b32.xlu0 %v38, 12
  %v835 = vpop.permute.xlu0 %834
  %836 = vrot.lane.b32.xlu0 %v39, 12
  %v837 = vpop.permute.xlu0 %836
  %838 = vrot.lane.b32.xlu0 %v40, 12
  %v839 = vpop.permute.xlu0 %838
  %840 = vrot.lane.b32.xlu0 %v41, 12
  %v841 = vpop.permute.xlu0 %840
  %842 = vrot.lane.b32.xlu0 %v42, 12
  %v843 = vpop.permute.xlu0 %842
  %844 = vrot.lane.b32.xlu0 %v43, 12
  %v845 = vpop.permute.xlu0 %844
  %846 = vrot.lane.b32.xlu0 %v44, 12
  %v847 = vpop.permute.xlu0 %846
  %848 = vrot.lane.b32.xlu0 %v45, 12
  %v849 = vpop.permute.xlu0 %848
  %850 = vrot.lane.b32.xlu0 %v46, 12
  %v851 = vpop.permute.xlu0 %850
  %852 = vrot.lane.b32.xlu0 %v47, 12
  %v853 = vpop.permute.xlu0 %852
  %854 = vrot.lane.b32.xlu0 %v48, 12
  %v855 = vpop.permute.xlu0 %854
  %856 = vrot.lane.b32.xlu0 %v49, 12
  %v857 = vpop.permute.xlu0 %856
  %858 = vrot.lane.b32.xlu0 %v50, 12
  %v859 = vpop.permute.xlu0 %858
  %860 = vrot.lane.b32.xlu0 %v51, 12
  %v861 = vpop.permute.xlu0 %860
  %862 = vrot.lane.b32.xlu0 %v52, 12
  %v863 = vpop.permute.xlu0 %862
  %864 = vrot.lane.b32.xlu0 %v53, 12
  %v865 = vpop.permute.xlu0 %864
  %866 = vrot.lane.b32.xlu0 %v54, 12
  %v867 = vpop.permute.xlu0 %866
  %868 = vrot.lane.b32.xlu0 %v55, 12
  %v869 = vpop.permute.xlu0 %868
  %870 = vrot.lane.b32.xlu0 %v56, 12
  %v871 = vpop.permute.xlu0 %870
  %872 = vrot.lane.b32.xlu0 %v57, 12
  %v873 = vpop.permute.xlu0 %872
  %874 = vrot.lane.b32.xlu0 %v58, 12
  %v875 = vpop.permute.xlu0 %874
  %876 = vrot.lane.b32.xlu0 %v59, 12
  %v877 = vpop.permute.xlu0 %876
  %878 = vrot.lane.b32.xlu0 %v60, 12
  %v879 = vpop.permute.xlu0 %878
  %880 = vrot.lane.b32.xlu0 %v61, 12
  %v881 = vpop.permute.xlu0 %880
  %882 = vrot.lane.b32.xlu0 %v62, 12
  %v883 = vpop.permute.xlu0 %882
  %884 = vrot.lane.b32.xlu0 %v63, 12
  %v885 = vpop.permute.xlu0 %884
  %886 = vrot.lane.b32.xlu0 %v64, 12
  %v887 = vpop.permute.xlu0 %886
  %888 = vrot.lane.b32.xlu0 %v65, 12
  %v889 = vpop.permute.xlu0 %888
  %890 = vrot.lane.b32.xlu0 %v66, 12
  %v891 = vpop.permute.xlu0 %890
  %892 = vrot.lane.b32.xlu0 %v67, 12
  %v893 = vpop.permute.xlu0 %892
  %894 = vrot.lane.b32.xlu0 %v68, 12
  %v895 = vpop.permute.xlu0 %894
  %896 = vrot.lane.b32.xlu0 %v69, 12
  %v897 = vpop.permute.xlu0 %896
  %898 = vrot.lane.b32.xlu0 %v70, 12
  %v899 = vpop.permute.xlu0 %898
  %900 = vrot.lane.b32.xlu0 %v71, 12
  %v901 = vpop.permute.xlu0 %900
  %902 = vrot.lane.b32.xlu0 %v72, 12
  %v903 = vpop.permute.xlu0 %902
  %904 = vrot.lane.b32.xlu0 %v73, 12
  %v905 = vpop.permute.xlu0 %904
  %906 = vrot.lane.b32.xlu0 %v74, 12
  %v907 = vpop.permute.xlu0 %906
  %908 = vrot.lane.b32.xlu0 %v75, 12
  %v909 = vpop.permute.xlu0 %908
  %910 = vrot.lane.b32.xlu0 %v76, 12
  %v911 = vpop.permute.xlu0 %910
  %912 = vrot.lane.b32.xlu0 %v77, 12
  %v913 = vpop.permute.xlu0 %912
  %914 = vrot.lane.b32.xlu0 %v14, 12
  %v915 = vpop.permute.xlu0 %914
  %916 = vrot.lane.b32.xlu0 %v15, 12
  %v917 = vpop.permute.xlu0 %916
  %982 = vrot.lane.b32.xlu0 %v149, 16
  %v983 = vpop.permute.xlu0 %982
  %984 = vrot.lane.b32.xlu0 %v151, 16
  %v985 = vpop.permute.xlu0 %984
  %986 = vrot.lane.b32.xlu0 %v153, 16
  %v987 = vpop.permute.xlu0 %986
  %988 = vrot.lane.b32.xlu0 %v155, 16
  %v989 = vpop.permute.xlu0 %988
  %990 = vrot.lane.b32.xlu0 %v157, 16
  %v991 = vpop.permute.xlu0 %990
  %992 = vrot.lane.b32.xlu0 %v159, 16
  %v993 = vpop.permute.xlu0 %992
  %994 = vrot.lane.b32.xlu0 %v161, 16
  %v995 = vpop.permute.xlu0 %994
  %996 = vrot.lane.b32.xlu0 %v163, 16
  %v997 = vpop.permute.xlu0 %996
  %998 = vrot.lane.b32.xlu0 %v165, 16
  %v999 = vpop.permute.xlu0 %998
  %1000 = vrot.lane.b32.xlu0 %v167, 16
  %v1001 = vpop.permute.xlu0 %1000
  %1002 = vrot.lane.b32.xlu0 %v169, 16
  %v1003 = vpop.permute.xlu0 %1002
  %1004 = vrot.lane.b32.xlu0 %v171, 16
  %v1005 = vpop.permute.xlu0 %1004
  %1006 = vrot.lane.b32.xlu0 %v173, 16
  %v1007 = vpop.permute.xlu0 %1006
  %1008 = vrot.lane.b32.xlu0 %v175, 16
  %v1009 = vpop.permute.xlu0 %1008
  %1010 = vrot.lane.b32.xlu0 %v177, 16
  %v1011 = vpop.permute.xlu0 %1010
  %1012 = vrot.lane.b32.xlu0 %v179, 16
  %v1013 = vpop.permute.xlu0 %1012
  %1014 = vrot.lane.b32.xlu0 %v181, 16
  %v1015 = vpop.permute.xlu0 %1014
  %1016 = vrot.lane.b32.xlu0 %v183, 16
  %v1017 = vpop.permute.xlu0 %1016
  %1018 = vrot.lane.b32.xlu0 %v185, 16
  %v1019 = vpop.permute.xlu0 %1018
  %1020 = vrot.lane.b32.xlu0 %v187, 16
  %v1021 = vpop.permute.xlu0 %1020
  %1022 = vrot.lane.b32.xlu0 %v189, 16
  %v1023 = vpop.permute.xlu0 %1022
  %1024 = vrot.lane.b32.xlu0 %v191, 16
  %v1025 = vpop.permute.xlu0 %1024
  %1026 = vrot.lane.b32.xlu0 %v193, 16
  %v1027 = vpop.permute.xlu0 %1026
  %1028 = vrot.lane.b32.xlu0 %v195, 16
  %v1029 = vpop.permute.xlu0 %1028
  %1030 = vrot.lane.b32.xlu0 %v197, 16
  %v1031 = vpop.permute.xlu0 %1030
  %1032 = vrot.lane.b32.xlu0 %v199, 16
  %v1033 = vpop.permute.xlu0 %1032
  %1034 = vrot.lane.b32.xlu0 %v201, 16
  %v1035 = vpop.permute.xlu0 %1034
  %1036 = vrot.lane.b32.xlu0 %v203, 16
  %v1037 = vpop.permute.xlu0 %1036
  %1038 = vrot.lane.b32.xlu0 %v205, 16
  %v1039 = vpop.permute.xlu0 %1038
  %1040 = vrot.lane.b32.xlu0 %v207, 16
  %v1041 = vpop.permute.xlu0 %1040
  %1042 = vrot.lane.b32.xlu0 %v209, 16
  %v1043 = vpop.permute.xlu0 %1042
  %1044 = vrot.lane.b32.xlu0 %v211, 16
  %v1045 = vpop.permute.xlu0 %1044
  %1046 = vrot.lane.b32.xlu0 %v213, 16
  %v1047 = vpop.permute.xlu0 %1046
  %1048 = vrot.lane.b32.xlu0 %v215, 16
  %v1049 = vpop.permute.xlu0 %1048
  %1050 = vrot.lane.b32.xlu0 %v217, 16
  %v1051 = vpop.permute.xlu0 %1050
  %1052 = vrot.lane.b32.xlu0 %v219, 16
  %v1053 = vpop.permute.xlu0 %1052
  %1054 = vrot.lane.b32.xlu0 %v221, 16
  %v1055 = vpop.permute.xlu0 %1054
  %1056 = vrot.lane.b32.xlu0 %v223, 16
  %v1057 = vpop.permute.xlu0 %1056
  %1058 = vrot.lane.b32.xlu0 %v225, 16
  %v1059 = vpop.permute.xlu0 %1058
  %1060 = vrot.lane.b32.xlu0 %v227, 16
  %v1061 = vpop.permute.xlu0 %1060
  %1062 = vrot.lane.b32.xlu0 %v229, 16
  %v1063 = vpop.permute.xlu0 %1062
  %1064 = vrot.lane.b32.xlu0 %v231, 16
  %v1065 = vpop.permute.xlu0 %1064
  %1066 = vrot.lane.b32.xlu0 %v233, 16
  %v1067 = vpop.permute.xlu0 %1066
  %1068 = vrot.lane.b32.xlu0 %v235, 16
  %v1069 = vpop.permute.xlu0 %1068
  %1070 = vrot.lane.b32.xlu0 %v237, 16
  %v1071 = vpop.permute.xlu0 %1070
  %1072 = vrot.lane.b32.xlu0 %v239, 16
  %v1073 = vpop.permute.xlu0 %1072
  %1074 = vrot.lane.b32.xlu0 %v241, 16
  %v1075 = vpop.permute.xlu0 %1074
  %1076 = vrot.lane.b32.xlu0 %v243, 16
  %v1077 = vpop.permute.xlu0 %1076
  %1078 = vrot.lane.b32.xlu0 %v245, 16
  %v1079 = vpop.permute.xlu0 %1078
  %1080 = vrot.lane.b32.xlu0 %v247, 16
  %v1081 = vpop.permute.xlu0 %1080
  %1082 = vrot.lane.b32.xlu0 %v249, 16
  %v1083 = vpop.permute.xlu0 %1082
  %1084 = vrot.lane.b32.xlu0 %v251, 16
  %v1085 = vpop.permute.xlu0 %1084
  %1086 = vrot.lane.b32.xlu0 %v253, 16
  %v1087 = vpop.permute.xlu0 %1086
  %1088 = vrot.lane.b32.xlu0 %v255, 16
  %v1089 = vpop.permute.xlu0 %1088
  %1090 = vrot.lane.b32.xlu0 %v257, 16
  %v1091 = vpop.permute.xlu0 %1090
  %1092 = vrot.lane.b32.xlu0 %v259, 16
  %v1093 = vpop.permute.xlu0 %1092
  %1094 = vrot.lane.b32.xlu0 %v261, 16
  %v1095 = vpop.permute.xlu0 %1094
  %1096 = vrot.lane.b32.xlu0 %v263, 16
  %v1097 = vpop.permute.xlu0 %1096
  %1098 = vrot.lane.b32.xlu0 %v265, 16
  %v1099 = vpop.permute.xlu0 %1098
  %1100 = vrot.lane.b32.xlu0 %v267, 16
  %v1101 = vpop.permute.xlu0 %1100
  %1102 = vrot.lane.b32.xlu0 %v269, 16
  %v1103 = vpop.permute.xlu0 %1102
  %1104 = vrot.lane.b32.xlu0 %v272, 16
  %v1105 = vpop.permute.xlu0 %1104
  %1106 = vrot.lane.b32.xlu0 %v145, 16
  %v1107 = vpop.permute.xlu0 %1106
  %1108 = vrot.lane.b32.xlu0 %v147, 16
  %v1109 = vpop.permute.xlu0 %1108
  %1174 = vrot.lane.b32.xlu0 %v280, 20
  %v1175 = vpop.permute.xlu0 %1174
  %1176 = vrot.lane.b32.xlu0 %v282, 20
  %v1177 = vpop.permute.xlu0 %1176
  %1178 = vrot.lane.b32.xlu0 %v284, 20
  %v1179 = vpop.permute.xlu0 %1178
  %1180 = vrot.lane.b32.xlu0 %v286, 20
  %v1181 = vpop.permute.xlu0 %1180
  %1182 = vrot.lane.b32.xlu0 %v288, 20
  %v1183 = vpop.permute.xlu0 %1182
  %1184 = vrot.lane.b32.xlu0 %v290, 20
  %v1185 = vpop.permute.xlu0 %1184
  %1186 = vrot.lane.b32.xlu0 %v292, 20
  %v1187 = vpop.permute.xlu0 %1186
  %1188 = vrot.lane.b32.xlu0 %v294, 20
  %v1189 = vpop.permute.xlu0 %1188
  %1190 = vrot.lane.b32.xlu0 %v296, 20
  %v1191 = vpop.permute.xlu0 %1190
  %1192 = vrot.lane.b32.xlu0 %v298, 20
  %v1193 = vpop.permute.xlu0 %1192
  %1194 = vrot.lane.b32.xlu0 %v300, 20
  %v1195 = vpop.permute.xlu0 %1194
  %1196 = vrot.lane.b32.xlu0 %v302, 20
  %v1197 = vpop.permute.xlu0 %1196
  %1198 = vrot.lane.b32.xlu0 %v304, 20
  %v1199 = vpop.permute.xlu0 %1198
  %1200 = vrot.lane.b32.xlu0 %v306, 20
  %v1201 = vpop.permute.xlu0 %1200
  %1202 = vrot.lane.b32.xlu0 %v308, 20
  %v1203 = vpop.permute.xlu0 %1202
  %1204 = vrot.lane.b32.xlu0 %v310, 20
  %v1205 = vpop.permute.xlu0 %1204
  %1206 = vrot.lane.b32.xlu0 %v312, 20
  %v1207 = vpop.permute.xlu0 %1206
  %1208 = vrot.lane.b32.xlu0 %v314, 20
  %v1209 = vpop.permute.xlu0 %1208
  %1210 = vrot.lane.b32.xlu0 %v316, 20
  %v1211 = vpop.permute.xlu0 %1210
  %1212 = vrot.lane.b32.xlu0 %v318, 20
  %v1213 = vpop.permute.xlu0 %1212
  %1214 = vrot.lane.b32.xlu0 %v320, 20
  %v1215 = vpop.permute.xlu0 %1214
  %1216 = vrot.lane.b32.xlu0 %v322, 20
  %v1217 = vpop.permute.xlu0 %1216
  %1218 = vrot.lane.b32.xlu0 %v324, 20
  %v1219 = vpop.permute.xlu0 %1218
  %1220 = vrot.lane.b32.xlu0 %v326, 20
  %v1221 = vpop.permute.xlu0 %1220
  %1222 = vrot.lane.b32.xlu0 %v328, 20
  %v1223 = vpop.permute.xlu0 %1222
  %1224 = vrot.lane.b32.xlu0 %v330, 20
  %v1225 = vpop.permute.xlu0 %1224
  %1226 = vrot.lane.b32.xlu0 %v332, 20
  %v1227 = vpop.permute.xlu0 %1226
  %1228 = vrot.lane.b32.xlu0 %v334, 20
  %v1229 = vpop.permute.xlu0 %1228
  %1230 = vrot.lane.b32.xlu0 %v336, 20
  %v1231 = vpop.permute.xlu0 %1230
  %1232 = vrot.lane.b32.xlu0 %v338, 20
  %v1233 = vpop.permute.xlu0 %1232
  %1234 = vrot.lane.b32.xlu0 %v340, 20
  %v1235 = vpop.permute.xlu0 %1234
  %1236 = vrot.lane.b32.xlu0 %v342, 20
  %v1237 = vpop.permute.xlu0 %1236
  %1238 = vrot.lane.b32.xlu0 %v344, 20
  %v1239 = vpop.permute.xlu0 %1238
  %1240 = vrot.lane.b32.xlu0 %v346, 20
  %v1241 = vpop.permute.xlu0 %1240
  %1242 = vrot.lane.b32.xlu0 %v348, 20
  %v1243 = vpop.permute.xlu0 %1242
  %1244 = vrot.lane.b32.xlu0 %v350, 20
  %v1245 = vpop.permute.xlu0 %1244
  %1246 = vrot.lane.b32.xlu0 %v352, 20
  %v1247 = vpop.permute.xlu0 %1246
  %1248 = vrot.lane.b32.xlu0 %v354, 20
  %v1249 = vpop.permute.xlu0 %1248
  %1250 = vrot.lane.b32.xlu0 %v356, 20
  %v1251 = vpop.permute.xlu0 %1250
  %1252 = vrot.lane.b32.xlu0 %v358, 20
  %v1253 = vpop.permute.xlu0 %1252
  %1254 = vrot.lane.b32.xlu0 %v360, 20
  %v1255 = vpop.permute.xlu0 %1254
  %1256 = vrot.lane.b32.xlu0 %v362, 20
  %v1257 = vpop.permute.xlu0 %1256
  %1258 = vrot.lane.b32.xlu0 %v364, 20
  %v1259 = vpop.permute.xlu0 %1258
  %1260 = vrot.lane.b32.xlu0 %v366, 20
  %v1261 = vpop.permute.xlu0 %1260
  %1262 = vrot.lane.b32.xlu0 %v368, 20
  %v1263 = vpop.permute.xlu0 %1262
  %1264 = vrot.lane.b32.xlu0 %v370, 20
  %v1265 = vpop.permute.xlu0 %1264
  %1266 = vrot.lane.b32.xlu0 %v372, 20
  %v1267 = vpop.permute.xlu0 %1266
  %1268 = vrot.lane.b32.xlu0 %v374, 20
  %v1269 = vpop.permute.xlu0 %1268
  %1270 = vrot.lane.b32.xlu0 %v376, 20
  %v1271 = vpop.permute.xlu0 %1270
  %1272 = vrot.lane.b32.xlu0 %v378, 20
  %v1273 = vpop.permute.xlu0 %1272
  %1274 = vrot.lane.b32.xlu0 %v380, 20
  %v1275 = vpop.permute.xlu0 %1274
  %1276 = vrot.lane.b32.xlu0 %v382, 20
  %v1277 = vpop.permute.xlu0 %1276
  %1278 = vrot.lane.b32.xlu0 %v384, 20
  %v1279 = vpop.permute.xlu0 %1278
  %1280 = vrot.lane.b32.xlu0 %v386, 20
  %v1281 = vpop.permute.xlu0 %1280
  %1282 = vrot.lane.b32.xlu0 %v388, 20
  %v1283 = vpop.permute.xlu0 %1282
  %1284 = vrot.lane.b32.xlu0 %v390, 20
  %v1285 = vpop.permute.xlu0 %1284
  %1286 = vrot.lane.b32.xlu0 %v392, 20
  %v1287 = vpop.permute.xlu0 %1286
  %1288 = vrot.lane.b32.xlu0 %v394, 20
  %v1289 = vpop.permute.xlu0 %1288
  %1290 = vrot.lane.b32.xlu0 %v396, 20
  %v1291 = vpop.permute.xlu0 %1290
  %1292 = vrot.lane.b32.xlu0 %v398, 20
  %v1293 = vpop.permute.xlu0 %1292
  %1294 = vrot.lane.b32.xlu0 %v400, 20
  %v1295 = vpop.permute.xlu0 %1294
  %1296 = vrot.lane.b32.xlu0 %v403, 20
  %v1297 = vpop.permute.xlu0 %1296
  %1298 = vrot.lane.b32.xlu0 %v276, 20
  %v1299 = vpop.permute.xlu0 %1298
  %1300 = vrot.lane.b32.xlu0 %v278, 20
  %v1301 = vpop.permute.xlu0 %1300
  %1366 = vrot.lane.b32.xlu0 %v18, 24
  %v1367 = vpop.permute.xlu0 %1366
  %1368 = vrot.lane.b32.xlu0 %v19, 24
  %v1369 = vpop.permute.xlu0 %1368
  %1370 = vrot.lane.b32.xlu0 %v20, 24
  %v1371 = vpop.permute.xlu0 %1370
  %1372 = vrot.lane.b32.xlu0 %v21, 24
  %v1373 = vpop.permute.xlu0 %1372
  %1374 = vrot.lane.b32.xlu0 %v22, 24
  %v1375 = vpop.permute.xlu0 %1374
  %1376 = vrot.lane.b32.xlu0 %v23, 24
  %v1377 = vpop.permute.xlu0 %1376
  %1378 = vrot.lane.b32.xlu0 %v24, 24
  %v1379 = vpop.permute.xlu0 %1378
  %1380 = vrot.lane.b32.xlu0 %v25, 24
  %v1381 = vpop.permute.xlu0 %1380
  %1382 = vrot.lane.b32.xlu0 %v26, 24
  %v1383 = vpop.permute.xlu0 %1382
  %1384 = vrot.lane.b32.xlu0 %v27, 24
  %v1385 = vpop.permute.xlu0 %1384
  %1386 = vrot.lane.b32.xlu0 %v28, 24
  %v1387 = vpop.permute.xlu0 %1386
  %1388 = vrot.lane.b32.xlu0 %v29, 24
  %v1389 = vpop.permute.xlu0 %1388
  %1390 = vrot.lane.b32.xlu0 %v30, 24
  %v1391 = vpop.permute.xlu0 %1390
  %1392 = vrot.lane.b32.xlu0 %v31, 24
  %v1393 = vpop.permute.xlu0 %1392
  %1394 = vrot.lane.b32.xlu0 %v32, 24
  %v1395 = vpop.permute.xlu0 %1394
  %1396 = vrot.lane.b32.xlu0 %v33, 24
  %v1397 = vpop.permute.xlu0 %1396
  %1398 = vrot.lane.b32.xlu0 %v34, 24
  %v1399 = vpop.permute.xlu0 %1398
  %1400 = vrot.lane.b32.xlu0 %v35, 24
  %v1401 = vpop.permute.xlu0 %1400
  %1402 = vrot.lane.b32.xlu0 %v36, 24
  %v1403 = vpop.permute.xlu0 %1402
  %1404 = vrot.lane.b32.xlu0 %v37, 24
  %v1405 = vpop.permute.xlu0 %1404
  %1406 = vrot.lane.b32.xlu0 %v38, 24
  %v1407 = vpop.permute.xlu0 %1406
  %1408 = vrot.lane.b32.xlu0 %v39, 24
  %v1409 = vpop.permute.xlu0 %1408
  %1410 = vrot.lane.b32.xlu0 %v40, 24
  %v1411 = vpop.permute.xlu0 %1410
  %1412 = vrot.lane.b32.xlu0 %v41, 24
  %v1413 = vpop.permute.xlu0 %1412
  %1414 = vrot.lane.b32.xlu0 %v42, 24
  %v1415 = vpop.permute.xlu0 %1414
  %1416 = vrot.lane.b32.xlu0 %v43, 24
  %v1417 = vpop.permute.xlu0 %1416
  %1418 = vrot.lane.b32.xlu0 %v44, 24
  %v1419 = vpop.permute.xlu0 %1418
  %1420 = vrot.lane.b32.xlu0 %v45, 24
  %v1421 = vpop.permute.xlu0 %1420
  %1422 = vrot.lane.b32.xlu0 %v46, 24
  %v1423 = vpop.permute.xlu0 %1422
  %1424 = vrot.lane.b32.xlu0 %v47, 24
  %v1425 = vpop.permute.xlu0 %1424
  %1426 = vrot.lane.b32.xlu0 %v48, 24
  %v1427 = vpop.permute.xlu0 %1426
  %1428 = vrot.lane.b32.xlu0 %v49, 24
  %v1429 = vpop.permute.xlu0 %1428
  %1430 = vrot.lane.b32.xlu0 %v50, 24
  %v1431 = vpop.permute.xlu0 %1430
  %1432 = vrot.lane.b32.xlu0 %v51, 24
  %v1433 = vpop.permute.xlu0 %1432
  %1434 = vrot.lane.b32.xlu0 %v52, 24
  %v1435 = vpop.permute.xlu0 %1434
  %1436 = vrot.lane.b32.xlu0 %v53, 24
  %v1437 = vpop.permute.xlu0 %1436
  %1438 = vrot.lane.b32.xlu0 %v54, 24
  %v1439 = vpop.permute.xlu0 %1438
  %1440 = vrot.lane.b32.xlu0 %v55, 24
  %v1441 = vpop.permute.xlu0 %1440
  %1442 = vrot.lane.b32.xlu0 %v56, 24
  %v1443 = vpop.permute.xlu0 %1442
  %1444 = vrot.lane.b32.xlu0 %v57, 24
  %v1445 = vpop.permute.xlu0 %1444
  %1446 = vrot.lane.b32.xlu0 %v58, 24
  %v1447 = vpop.permute.xlu0 %1446
  %1448 = vrot.lane.b32.xlu0 %v59, 24
  %v1449 = vpop.permute.xlu0 %1448
  %1450 = vrot.lane.b32.xlu0 %v60, 24
  %v1451 = vpop.permute.xlu0 %1450
  %1452 = vrot.lane.b32.xlu0 %v61, 24
  %v1453 = vpop.permute.xlu0 %1452
  %1454 = vrot.lane.b32.xlu0 %v62, 24
  %v1455 = vpop.permute.xlu0 %1454
  %1456 = vrot.lane.b32.xlu0 %v63, 24
  %v1457 = vpop.permute.xlu0 %1456
  %1458 = vrot.lane.b32.xlu0 %v64, 24
  %v1459 = vpop.permute.xlu0 %1458
  %1460 = vrot.lane.b32.xlu0 %v65, 24
  %v1461 = vpop.permute.xlu0 %1460
  %1462 = vrot.lane.b32.xlu0 %v66, 24
  %v1463 = vpop.permute.xlu0 %1462
  %1464 = vrot.lane.b32.xlu0 %v67, 24
  %v1465 = vpop.permute.xlu0 %1464
  %1466 = vrot.lane.b32.xlu0 %v68, 24
  %v1467 = vpop.permute.xlu0 %1466
  %1468 = vrot.lane.b32.xlu0 %v69, 24
  %v1469 = vpop.permute.xlu0 %1468
  %1470 = vrot.lane.b32.xlu0 %v70, 24
  %v1471 = vpop.permute.xlu0 %1470
  %1472 = vrot.lane.b32.xlu0 %v71, 24
  %v1473 = vpop.permute.xlu0 %1472
  %1474 = vrot.lane.b32.xlu0 %v72, 24
  %v1475 = vpop.permute.xlu0 %1474
  %1476 = vrot.lane.b32.xlu0 %v73, 24
  %v1477 = vpop.permute.xlu0 %1476
  %1478 = vrot.lane.b32.xlu0 %v74, 24
  %v1479 = vpop.permute.xlu0 %1478
  %1480 = vrot.lane.b32.xlu0 %v75, 24
  %v1481 = vpop.permute.xlu0 %1480
  %1482 = vrot.lane.b32.xlu0 %v76, 24
  %v1483 = vpop.permute.xlu0 %1482
  %1484 = vrot.lane.b32.xlu0 %v77, 24
  %v1485 = vpop.permute.xlu0 %1484
  %1486 = vrot.lane.b32.xlu0 %v14, 24
  %v1487 = vpop.permute.xlu0 %1486
  %1488 = vrot.lane.b32.xlu0 %v15, 24
  %v1489 = vpop.permute.xlu0 %1488
  %1490 = vrot.lane.b32.xlu0 %v16, 24
  %v1491 = vpop.permute.xlu0 %1490
  %1492 = vrot.lane.b32.xlu0 %v17, 24
  %v1493 = vpop.permute.xlu0 %1492
  %1558 = vrot.lane.b32.xlu0 %v153, 28
  %v1559 = vpop.permute.xlu0 %1558
  %1560 = vrot.lane.b32.xlu0 %v155, 28
  %v1561 = vpop.permute.xlu0 %1560
  %1562 = vrot.lane.b32.xlu0 %v157, 28
  %v1563 = vpop.permute.xlu0 %1562
  %1564 = vrot.lane.b32.xlu0 %v159, 28
  %v1565 = vpop.permute.xlu0 %1564
  %1566 = vrot.lane.b32.xlu0 %v161, 28
  %v1567 = vpop.permute.xlu0 %1566
  %1568 = vrot.lane.b32.xlu0 %v163, 28
  %v1569 = vpop.permute.xlu0 %1568
  %1570 = vrot.lane.b32.xlu0 %v165, 28
  %v1571 = vpop.permute.xlu0 %1570
  %1572 = vrot.lane.b32.xlu0 %v167, 28
  %v1573 = vpop.permute.xlu0 %1572
  %1574 = vrot.lane.b32.xlu0 %v169, 28
  %v1575 = vpop.permute.xlu0 %1574
  %1576 = vrot.lane.b32.xlu0 %v171, 28
  %v1577 = vpop.permute.xlu0 %1576
  %1578 = vrot.lane.b32.xlu0 %v173, 28
  %v1579 = vpop.permute.xlu0 %1578
  %1580 = vrot.lane.b32.xlu0 %v175, 28
  %v1581 = vpop.permute.xlu0 %1580
  %1582 = vrot.lane.b32.xlu0 %v177, 28
  %v1583 = vpop.permute.xlu0 %1582
  %1584 = vrot.lane.b32.xlu0 %v179, 28
  %v1585 = vpop.permute.xlu0 %1584
  %1586 = vrot.lane.b32.xlu0 %v181, 28
  %v1587 = vpop.permute.xlu0 %1586
  %1588 = vrot.lane.b32.xlu0 %v183, 28
  %v1589 = vpop.permute.xlu0 %1588
  %1590 = vrot.lane.b32.xlu0 %v185, 28
  %v1591 = vpop.permute.xlu0 %1590
  %1592 = vrot.lane.b32.xlu0 %v187, 28
  %v1593 = vpop.permute.xlu0 %1592
  %1594 = vrot.lane.b32.xlu0 %v189, 28
  %v1595 = vpop.permute.xlu0 %1594
  %1596 = vrot.lane.b32.xlu0 %v191, 28
  %v1597 = vpop.permute.xlu0 %1596
  %1598 = vrot.lane.b32.xlu0 %v193, 28
  %v1599 = vpop.permute.xlu0 %1598
  %1600 = vrot.lane.b32.xlu0 %v195, 28
  %v1601 = vpop.permute.xlu0 %1600
  %1602 = vrot.lane.b32.xlu0 %v197, 28
  %v1603 = vpop.permute.xlu0 %1602
  %1604 = vrot.lane.b32.xlu0 %v199, 28
  %v1605 = vpop.permute.xlu0 %1604
  %1606 = vrot.lane.b32.xlu0 %v201, 28
  %v1607 = vpop.permute.xlu0 %1606
  %1608 = vrot.lane.b32.xlu0 %v203, 28
  %v1609 = vpop.permute.xlu0 %1608
  %1610 = vrot.lane.b32.xlu0 %v205, 28
  %v1611 = vpop.permute.xlu0 %1610
  %1612 = vrot.lane.b32.xlu0 %v207, 28
  %v1613 = vpop.permute.xlu0 %1612
  %1614 = vrot.lane.b32.xlu0 %v209, 28
  %v1615 = vpop.permute.xlu0 %1614
  %1616 = vrot.lane.b32.xlu0 %v211, 28
  %v1617 = vpop.permute.xlu0 %1616
  %1618 = vrot.lane.b32.xlu0 %v213, 28
  %v1619 = vpop.permute.xlu0 %1618
  %1620 = vrot.lane.b32.xlu0 %v215, 28
  %v1621 = vpop.permute.xlu0 %1620
  %1622 = vrot.lane.b32.xlu0 %v217, 28
  %v1623 = vpop.permute.xlu0 %1622
  %1624 = vrot.lane.b32.xlu0 %v219, 28
  %v1625 = vpop.permute.xlu0 %1624
  %1626 = vrot.lane.b32.xlu0 %v221, 28
  %v1627 = vpop.permute.xlu0 %1626
  %1628 = vrot.lane.b32.xlu0 %v223, 28
  %v1629 = vpop.permute.xlu0 %1628
  %1630 = vrot.lane.b32.xlu0 %v225, 28
  %v1631 = vpop.permute.xlu0 %1630
  %1632 = vrot.lane.b32.xlu0 %v227, 28
  %v1633 = vpop.permute.xlu0 %1632
  %1634 = vrot.lane.b32.xlu0 %v229, 28
  %v1635 = vpop.permute.xlu0 %1634
  %1636 = vrot.lane.b32.xlu0 %v231, 28
  %v1637 = vpop.permute.xlu0 %1636
  %1638 = vrot.lane.b32.xlu0 %v233, 28
  %v1639 = vpop.permute.xlu0 %1638
  %1640 = vrot.lane.b32.xlu0 %v235, 28
  %v1641 = vpop.permute.xlu0 %1640
  %1642 = vrot.lane.b32.xlu0 %v237, 28
  %v1643 = vpop.permute.xlu0 %1642
  %1644 = vrot.lane.b32.xlu0 %v239, 28
  %v1645 = vpop.permute.xlu0 %1644
  %1646 = vrot.lane.b32.xlu0 %v241, 28
  %v1647 = vpop.permute.xlu0 %1646
  %1648 = vrot.lane.b32.xlu0 %v243, 28
  %v1649 = vpop.permute.xlu0 %1648
  %1650 = vrot.lane.b32.xlu0 %v245, 28
  %v1651 = vpop.permute.xlu0 %1650
  %1652 = vrot.lane.b32.xlu0 %v247, 28
  %v1653 = vpop.permute.xlu0 %1652
  %1654 = vrot.lane.b32.xlu0 %v249, 28
  %v1655 = vpop.permute.xlu0 %1654
  %1656 = vrot.lane.b32.xlu0 %v251, 28
  %v1657 = vpop.permute.xlu0 %1656
  %1658 = vrot.lane.b32.xlu0 %v253, 28
  %v1659 = vpop.permute.xlu0 %1658
  %1660 = vrot.lane.b32.xlu0 %v255, 28
  %v1661 = vpop.permute.xlu0 %1660
  %1662 = vrot.lane.b32.xlu0 %v257, 28
  %v1663 = vpop.permute.xlu0 %1662
  %1664 = vrot.lane.b32.xlu0 %v259, 28
  %v1665 = vpop.permute.xlu0 %1664
  %1666 = vrot.lane.b32.xlu0 %v261, 28
  %v1667 = vpop.permute.xlu0 %1666
  %1668 = vrot.lane.b32.xlu0 %v263, 28
  %v1669 = vpop.permute.xlu0 %1668
  %1670 = vrot.lane.b32.xlu0 %v265, 28
  %v1671 = vpop.permute.xlu0 %1670
  %1672 = vrot.lane.b32.xlu0 %v267, 28
  %v1673 = vpop.permute.xlu0 %1672
  %1674 = vrot.lane.b32.xlu0 %v269, 28
  %v1675 = vpop.permute.xlu0 %1674
  %1676 = vrot.lane.b32.xlu0 %v272, 28
  %v1677 = vpop.permute.xlu0 %1676
  %1678 = vrot.lane.b32.xlu0 %v145, 28
  %v1679 = vpop.permute.xlu0 %1678
  %1680 = vrot.lane.b32.xlu0 %v147, 28
  %v1681 = vpop.permute.xlu0 %1680
  %1682 = vrot.lane.b32.xlu0 %v149, 28
  %v1683 = vpop.permute.xlu0 %1682
  %1684 = vrot.lane.b32.xlu0 %v151, 28
  %v1685 = vpop.permute.xlu0 %1684
  %1750 = vrot.lane.b32.xlu0 %v284, 32
  %v1751 = vpop.permute.xlu0 %1750
  %1752 = vrot.lane.b32.xlu0 %v286, 32
  %v1753 = vpop.permute.xlu0 %1752
  %1754 = vrot.lane.b32.xlu0 %v288, 32
  %v1755 = vpop.permute.xlu0 %1754
  %1756 = vrot.lane.b32.xlu0 %v290, 32
  %v1757 = vpop.permute.xlu0 %1756
  %1758 = vrot.lane.b32.xlu0 %v292, 32
  %v1759 = vpop.permute.xlu0 %1758
  %1760 = vrot.lane.b32.xlu0 %v294, 32
  %v1761 = vpop.permute.xlu0 %1760
  %1762 = vrot.lane.b32.xlu0 %v296, 32
  %v1763 = vpop.permute.xlu0 %1762
  %1764 = vrot.lane.b32.xlu0 %v298, 32
  %v1765 = vpop.permute.xlu0 %1764
  %1766 = vrot.lane.b32.xlu0 %v300, 32
  %v1767 = vpop.permute.xlu0 %1766
  %1768 = vrot.lane.b32.xlu0 %v302, 32
  %v1769 = vpop.permute.xlu0 %1768
  %1770 = vrot.lane.b32.xlu0 %v304, 32
  %v1771 = vpop.permute.xlu0 %1770
  %1772 = vrot.lane.b32.xlu0 %v306, 32
  %v1773 = vpop.permute.xlu0 %1772
  %1774 = vrot.lane.b32.xlu0 %v308, 32
  %v1775 = vpop.permute.xlu0 %1774
  %1776 = vrot.lane.b32.xlu0 %v310, 32
  %v1777 = vpop.permute.xlu0 %1776
  %1778 = vrot.lane.b32.xlu0 %v312, 32
  %v1779 = vpop.permute.xlu0 %1778
  %1780 = vrot.lane.b32.xlu0 %v314, 32
  %v1781 = vpop.permute.xlu0 %1780
  %1782 = vrot.lane.b32.xlu0 %v316, 32
  %v1783 = vpop.permute.xlu0 %1782
  %1784 = vrot.lane.b32.xlu0 %v318, 32
  %v1785 = vpop.permute.xlu0 %1784
  %1786 = vrot.lane.b32.xlu0 %v320, 32
  %v1787 = vpop.permute.xlu0 %1786
  %1788 = vrot.lane.b32.xlu0 %v322, 32
  %v1789 = vpop.permute.xlu0 %1788
  %1790 = vrot.lane.b32.xlu0 %v324, 32
  %v1791 = vpop.permute.xlu0 %1790
  %1792 = vrot.lane.b32.xlu0 %v326, 32
  %v1793 = vpop.permute.xlu0 %1792
  %1794 = vrot.lane.b32.xlu0 %v328, 32
  %v1795 = vpop.permute.xlu0 %1794
  %1796 = vrot.lane.b32.xlu0 %v330, 32
  %v1797 = vpop.permute.xlu0 %1796
  %1798 = vrot.lane.b32.xlu0 %v332, 32
  %v1799 = vpop.permute.xlu0 %1798
  %1800 = vrot.lane.b32.xlu0 %v334, 32
  %v1801 = vpop.permute.xlu0 %1800
  %1802 = vrot.lane.b32.xlu0 %v336, 32
  %v1803 = vpop.permute.xlu0 %1802
  %1804 = vrot.lane.b32.xlu0 %v338, 32
  %v1805 = vpop.permute.xlu0 %1804
  %1806 = vrot.lane.b32.xlu0 %v340, 32
  %v1807 = vpop.permute.xlu0 %1806
  %1808 = vrot.lane.b32.xlu0 %v342, 32
  %v1809 = vpop.permute.xlu0 %1808
  %1810 = vrot.lane.b32.xlu0 %v344, 32
  %v1811 = vpop.permute.xlu0 %1810
  %1812 = vrot.lane.b32.xlu0 %v346, 32
  %v1813 = vpop.permute.xlu0 %1812
  %1814 = vrot.lane.b32.xlu0 %v348, 32
  %v1815 = vpop.permute.xlu0 %1814
  %1816 = vrot.lane.b32.xlu0 %v350, 32
  %v1817 = vpop.permute.xlu0 %1816
  %1818 = vrot.lane.b32.xlu0 %v352, 32
  %v1819 = vpop.permute.xlu0 %1818
  %1820 = vrot.lane.b32.xlu0 %v354, 32
  %v1821 = vpop.permute.xlu0 %1820
  %1822 = vrot.lane.b32.xlu0 %v356, 32
  %v1823 = vpop.permute.xlu0 %1822
  %1824 = vrot.lane.b32.xlu0 %v358, 32
  %v1825 = vpop.permute.xlu0 %1824
  %1826 = vrot.lane.b32.xlu0 %v360, 32
  %v1827 = vpop.permute.xlu0 %1826
  %1828 = vrot.lane.b32.xlu0 %v362, 32
  %v1829 = vpop.permute.xlu0 %1828
  %1830 = vrot.lane.b32.xlu0 %v364, 32
  %v1831 = vpop.permute.xlu0 %1830
  %1832 = vrot.lane.b32.xlu0 %v366, 32
  %v1833 = vpop.permute.xlu0 %1832
  %1834 = vrot.lane.b32.xlu0 %v368, 32
  %v1835 = vpop.permute.xlu0 %1834
  %1836 = vrot.lane.b32.xlu0 %v370, 32
  %v1837 = vpop.permute.xlu0 %1836
  %1838 = vrot.lane.b32.xlu0 %v372, 32
  %v1839 = vpop.permute.xlu0 %1838
  %1840 = vrot.lane.b32.xlu0 %v374, 32
  %v1841 = vpop.permute.xlu0 %1840
  %1842 = vrot.lane.b32.xlu0 %v376, 32
  %v1843 = vpop.permute.xlu0 %1842
  %1844 = vrot.lane.b32.xlu0 %v378, 32
  %v1845 = vpop.permute.xlu0 %1844
  %1846 = vrot.lane.b32.xlu0 %v380, 32
  %v1847 = vpop.permute.xlu0 %1846
  %1848 = vrot.lane.b32.xlu0 %v382, 32
  %v1849 = vpop.permute.xlu0 %1848
  %1850 = vrot.lane.b32.xlu0 %v384, 32
  %v1851 = vpop.permute.xlu0 %1850
  %1852 = vrot.lane.b32.xlu0 %v386, 32
  %v1853 = vpop.permute.xlu0 %1852
  %1854 = vrot.lane.b32.xlu0 %v388, 32
  %v1855 = vpop.permute.xlu0 %1854
  %1856 = vrot.lane.b32.xlu0 %v390, 32
  %v1857 = vpop.permute.xlu0 %1856
  %1858 = vrot.lane.b32.xlu0 %v392, 32
  %v1859 = vpop.permute.xlu0 %1858
  %1860 = vrot.lane.b32.xlu0 %v394, 32
  %v1861 = vpop.permute.xlu0 %1860
  %1862 = vrot.lane.b32.xlu0 %v396, 32
  %v1863 = vpop.permute.xlu0 %1862
  %1864 = vrot.lane.b32.xlu0 %v398, 32
  %v1865 = vpop.permute.xlu0 %1864
  %1866 = vrot.lane.b32.xlu0 %v400, 32
  %v1867 = vpop.permute.xlu0 %1866
  %1868 = vrot.lane.b32.xlu0 %v403, 32
  %v1869 = vpop.permute.xlu0 %1868
  %1870 = vrot.lane.b32.xlu0 %v276, 32
  %v1871 = vpop.permute.xlu0 %1870
  %1872 = vrot.lane.b32.xlu0 %v278, 32
  %v1873 = vpop.permute.xlu0 %1872
  %1874 = vrot.lane.b32.xlu0 %v280, 32
  %v1875 = vpop.permute.xlu0 %1874
  %1876 = vrot.lane.b32.xlu0 %v282, 32
  %v1877 = vpop.permute.xlu0 %1876
  %vm1942 = vcmask 31744
  %v1943 = vsel %vm1942, %v14, %v406
  %v1944 = vsel %vm1942, %v15, %v408
  %v1945 = vsel %vm1942, %v16, %v410
  %v1946 = vsel %vm1942, %v17, %v412
  %v1947 = vsel %vm1942, %v18, %v414
  %v1948 = vsel %vm1942, %v19, %v416
  %v1949 = vsel %vm1942, %v20, %v418
  %v1950 = vsel %vm1942, %v21, %v420
  %v1951 = vsel %vm1942, %v22, %v422
  %v1952 = vsel %vm1942, %v23, %v424
  %v1953 = vsel %vm1942, %v24, %v426
  %v1954 = vsel %vm1942, %v25, %v428
  %v1955 = vsel %vm1942, %v26, %v430
  %v1956 = vsel %vm1942, %v27, %v432
  %v1957 = vsel %vm1942, %v28, %v434
  %v1958 = vsel %vm1942, %v29, %v436
  %v1959 = vsel %vm1942, %v30, %v438
  %v1960 = vsel %vm1942, %v31, %v440
  %v1961 = vsel %vm1942, %v32, %v442
  %v1962 = vsel %vm1942, %v33, %v444
  %v1963 = vsel %vm1942, %v34, %v446
  %v1964 = vsel %vm1942, %v35, %v448
  %v1965 = vsel %vm1942, %v36, %v450
  %v1966 = vsel %vm1942, %v37, %v452
  %v1967 = vsel %vm1942, %v38, %v454
  %v1968 = vsel %vm1942, %v39, %v456
  %v1969 = vsel %vm1942, %v40, %v458
  %v1970 = vsel %vm1942, %v41, %v460
  %v1971 = vsel %vm1942, %v42, %v462
  %v1972 = vsel %vm1942, %v43, %v464
  %v1973 = vsel %vm1942, %v44, %v466
  %v1974 = vsel %vm1942, %v45, %v468
  %v1975 = vsel %vm1942, %v46, %v470
  %v1976 = vsel %vm1942, %v47, %v472
  %v1977 = vsel %vm1942, %v48, %v474
  %v1978 = vsel %vm1942, %v49, %v476
  %v1979 = vsel %vm1942, %v50, %v478
  %v1980 = vsel %vm1942, %v51, %v480
  %v1981 = vsel %vm1942, %v52, %v482
  %v1982 = vsel %vm1942, %v53, %v484
  %v1983 = vsel %vm1942, %v54, %v486
  %v1984 = vsel %vm1942, %v55, %v488
  %v1985 = vsel %vm1942, %v56, %v490
  %v1986 = vsel %vm1942, %v57, %v492
  %v1987 = vsel %vm1942, %v58, %v494
  %v1988 = vsel %vm1942, %v59, %v496
  %v1989 = vsel %vm1942, %v60, %v498
  %v1990 = vsel %vm1942, %v61, %v500
  %v1991 = vsel %vm1942, %v62, %v502
  %v1992 = vsel %vm1942, %v63, %v504
  %v1993 = vsel %vm1942, %v64, %v506
  %v1994 = vsel %vm1942, %v65, %v508
  %v1995 = vsel %vm1942, %v66, %v510
  %v1996 = vsel %vm1942, %v67, %v512
  %v1997 = vsel %vm1942, %v68, %v514
  %v1998 = vsel %vm1942, %v69, %v516
  %v1999 = vsel %vm1942, %v70, %v518
  %v2000 = vsel %vm1942, %v71, %v520
  %v2001 = vsel %vm1942, %v72, %v522
  %v2002 = vsel %vm1942, %v73, %v524
  %v2003 = vsel %vm1942, %v74, %v526
  %v2004 = vsel %vm1942, %v75, %v528
  %v2005 = vsel %vm1942, %v76, %v530
  %v2006 = vsel %vm1942, %v77, %v532
  %vm2007 = vcmask 64512
  %v2008 = vsel %vm2007, %v1943, %v599
  %v2009 = vsel %vm2007, %v1944, %v601
  %v2010 = vsel %vm2007, %v1945, %v603
  %v2011 = vsel %vm2007, %v1946, %v605
  %v2012 = vsel %vm2007, %v1947, %v607
  %v2013 = vsel %vm2007, %v1948, %v609
  %v2014 = vsel %vm2007, %v1949, %v611
  %v2015 = vsel %vm2007, %v1950, %v613
  %v2016 = vsel %vm2007, %v1951, %v615
  %v2017 = vsel %vm2007, %v1952, %v617
  %v2018 = vsel %vm2007, %v1953, %v619
  %v2019 = vsel %vm2007, %v1954, %v621
  %v2020 = vsel %vm2007, %v1955, %v623
  %v2021 = vsel %vm2007, %v1956, %v625
  %v2022 = vsel %vm2007, %v1957, %v627
  %v2023 = vsel %vm2007, %v1958, %v629
  %v2024 = vsel %vm2007, %v1959, %v631
  %v2025 = vsel %vm2007, %v1960, %v633
  %v2026 = vsel %vm2007, %v1961, %v635
  %v2027 = vsel %vm2007, %v1962, %v637
  %v2028 = vsel %vm2007, %v1963, %v639
  %v2029 = vsel %vm2007, %v1964, %v641
  %v2030 = vsel %vm2007, %v1965, %v643
  %v2031 = vsel %vm2007, %v1966, %v645
  %v2032 = vsel %vm2007, %v1967, %v647
  %v2033 = vsel %vm2007, %v1968, %v649
  %v2034 = vsel %vm2007, %v1969, %v651
  %v2035 = vsel %vm2007, %v1970, %v653
  %v2036 = vsel %vm2007, %v1971, %v655
  %v2037 = vsel %vm2007, %v1972, %v657
  %v2038 = vsel %vm2007, %v1973, %v659
  %v2039 = vsel %vm2007, %v1974, %v661
  %v2040 = vsel %vm2007, %v1975, %v663
  %v2041 = vsel %vm2007, %v1976, %v665
  %v2042 = vsel %vm2007, %v1977, %v667
  %v2043 = vsel %vm2007, %v1978, %v669
  %v2044 = vsel %vm2007, %v1979, %v671
  %v2045 = vsel %vm2007, %v1980, %v673
  %v2046 = vsel %vm2007, %v1981, %v675
  %v2047 = vsel %vm2007, %v1982, %v677
  %v2048 = vsel %vm2007, %v1983, %v679
  %v2049 = vsel %vm2007, %v1984, %v681
  %v2050 = vsel %vm2007, %v1985, %v683
  %v2051 = vsel %vm2007, %v1986, %v685
  %v2052 = vsel %vm2007, %v1987, %v687
  %v2053 = vsel %vm2007, %v1988, %v689
  %v2054 = vsel %vm2007, %v1989, %v691
  %v2055 = vsel %vm2007, %v1990, %v693
  %v2056 = vsel %vm2007, %v1991, %v695
  %v2057 = vsel %vm2007, %v1992, %v697
  %v2058 = vsel %vm2007, %v1993, %v699
  %v2059 = vsel %vm2007, %v1994, %v701
  %v2060 = vsel %vm2007, %v1995, %v703
  %v2061 = vsel %vm2007, %v1996, %v705
  %v2062 = vsel %vm2007, %v1997, %v707
  %v2063 = vsel %vm2007, %v1998, %v709
  %v2064 = vsel %vm2007, %v1999, %v711
  %v2065 = vsel %vm2007, %v2000, %v713
  %v2066 = vsel %vm2007, %v2001, %v715
  %v2067 = vsel %vm2007, %v2002, %v717
  %v2068 = vsel %vm2007, %v2003, %v719
  %v2069 = vsel %vm2007, %v2004, %v721
  %v2070 = vsel %vm2007, %v2005, %v723
  %v2071 = vsel %vm2007, %v2006, %v725
  %vm2072 = vcmask 97280
  %v2073 = vsel %vm2072, %v2008, %v791
  %v2074 = vsel %vm2072, %v2009, %v793
  %v2075 = vsel %vm2072, %v2010, %v795
  %v2076 = vsel %vm2072, %v2011, %v797
  %v2077 = vsel %vm2072, %v2012, %v799
  %v2078 = vsel %vm2072, %v2013, %v801
  %v2079 = vsel %vm2072, %v2014, %v803
  %v2080 = vsel %vm2072, %v2015, %v805
  %v2081 = vsel %vm2072, %v2016, %v807
  %v2082 = vsel %vm2072, %v2017, %v809
  %v2083 = vsel %vm2072, %v2018, %v811
  %v2084 = vsel %vm2072, %v2019, %v813
  %v2085 = vsel %vm2072, %v2020, %v815
  %v2086 = vsel %vm2072, %v2021, %v817
  %v2087 = vsel %vm2072, %v2022, %v819
  %v2088 = vsel %vm2072, %v2023, %v821
  %v2089 = vsel %vm2072, %v2024, %v823
  %v2090 = vsel %vm2072, %v2025, %v825
  %v2091 = vsel %vm2072, %v2026, %v827
  %v2092 = vsel %vm2072, %v2027, %v829
  %v2093 = vsel %vm2072, %v2028, %v831
  %v2094 = vsel %vm2072, %v2029, %v833
  %v2095 = vsel %vm2072, %v2030, %v835
  %v2096 = vsel %vm2072, %v2031, %v837
  %v2097 = vsel %vm2072, %v2032, %v839
  %v2098 = vsel %vm2072, %v2033, %v841
  %v2099 = vsel %vm2072, %v2034, %v843
  %v2100 = vsel %vm2072, %v2035, %v845
  %v2101 = vsel %vm2072, %v2036, %v847
  %v2102 = vsel %vm2072, %v2037, %v849
  %v2103 = vsel %vm2072, %v2038, %v851
  %v2104 = vsel %vm2072, %v2039, %v853
  %v2105 = vsel %vm2072, %v2040, %v855
  %v2106 = vsel %vm2072, %v2041, %v857
  %v2107 = vsel %vm2072, %v2042, %v859
  %v2108 = vsel %vm2072, %v2043, %v861
  %v2109 = vsel %vm2072, %v2044, %v863
  %v2110 = vsel %vm2072, %v2045, %v865
  %v2111 = vsel %vm2072, %v2046, %v867
  %v2112 = vsel %vm2072, %v2047, %v869
  %v2113 = vsel %vm2072, %v2048, %v871
  %v2114 = vsel %vm2072, %v2049, %v873
  %v2115 = vsel %vm2072, %v2050, %v875
  %v2116 = vsel %vm2072, %v2051, %v877
  %v2117 = vsel %vm2072, %v2052, %v879
  %v2118 = vsel %vm2072, %v2053, %v881
  %v2119 = vsel %vm2072, %v2054, %v883
  %v2120 = vsel %vm2072, %v2055, %v885
  %v2121 = vsel %vm2072, %v2056, %v887
  %v2122 = vsel %vm2072, %v2057, %v889
  %v2123 = vsel %vm2072, %v2058, %v891
  %v2124 = vsel %vm2072, %v2059, %v893
  %v2125 = vsel %vm2072, %v2060, %v895
  %v2126 = vsel %vm2072, %v2061, %v897
  %v2127 = vsel %vm2072, %v2062, %v899
  %v2128 = vsel %vm2072, %v2063, %v901
  %v2129 = vsel %vm2072, %v2064, %v903
  %v2130 = vsel %vm2072, %v2065, %v905
  %v2131 = vsel %vm2072, %v2066, %v907
  %v2132 = vsel %vm2072, %v2067, %v909
  %v2133 = vsel %vm2072, %v2068, %v911
  %v2134 = vsel %vm2072, %v2069, %v913
  %v2135 = vsel %vm2072, %v2070, %v915
  %v2136 = vsel %vm2072, %v2071, %v917
  %vm2137 = vcmask 130048
  %v2138 = vsel %vm2137, %v2073, %v983
  %v2139 = vsel %vm2137, %v2074, %v985
  %v2140 = vsel %vm2137, %v2075, %v987
  %v2141 = vsel %vm2137, %v2076, %v989
  %v2142 = vsel %vm2137, %v2077, %v991
  %v2143 = vsel %vm2137, %v2078, %v993
  %v2144 = vsel %vm2137, %v2079, %v995
  %v2145 = vsel %vm2137, %v2080, %v997
  %v2146 = vsel %vm2137, %v2081, %v999
  %v2147 = vsel %vm2137, %v2082, %v1001
  %v2148 = vsel %vm2137, %v2083, %v1003
  %v2149 = vsel %vm2137, %v2084, %v1005
  %v2150 = vsel %vm2137, %v2085, %v1007
  %v2151 = vsel %vm2137, %v2086, %v1009
  %v2152 = vsel %vm2137, %v2087, %v1011
  %v2153 = vsel %vm2137, %v2088, %v1013
  %v2154 = vsel %vm2137, %v2089, %v1015
  %v2155 = vsel %vm2137, %v2090, %v1017
  %v2156 = vsel %vm2137, %v2091, %v1019
  %v2157 = vsel %vm2137, %v2092, %v1021
  %v2158 = vsel %vm2137, %v2093, %v1023
  %v2159 = vsel %vm2137, %v2094, %v1025
  %v2160 = vsel %vm2137, %v2095, %v1027
  %v2161 = vsel %vm2137, %v2096, %v1029
  %v2162 = vsel %vm2137, %v2097, %v1031
  %v2163 = vsel %vm2137, %v2098, %v1033
  %v2164 = vsel %vm2137, %v2099, %v1035
  %v2165 = vsel %vm2137, %v2100, %v1037
  %v2166 = vsel %vm2137, %v2101, %v1039
  %v2167 = vsel %vm2137, %v2102, %v1041
  %v2168 = vsel %vm2137, %v2103, %v1043
  %v2169 = vsel %vm2137, %v2104, %v1045
  %v2170 = vsel %vm2137, %v2105, %v1047
  %v2171 = vsel %vm2137, %v2106, %v1049
  %v2172 = vsel %vm2137, %v2107, %v1051
  %v2173 = vsel %vm2137, %v2108, %v1053
  %v2174 = vsel %vm2137, %v2109, %v1055
  %v2175 = vsel %vm2137, %v2110, %v1057
  %v2176 = vsel %vm2137, %v2111, %v1059
  %v2177 = vsel %vm2137, %v2112, %v1061
  %v2178 = vsel %vm2137, %v2113, %v1063
  %v2179 = vsel %vm2137, %v2114, %v1065
  %v2180 = vsel %vm2137, %v2115, %v1067
  %v2181 = vsel %vm2137, %v2116, %v1069
  %v2182 = vsel %vm2137, %v2117, %v1071
  %v2183 = vsel %vm2137, %v2118, %v1073
  %v2184 = vsel %vm2137, %v2119, %v1075
  %v2185 = vsel %vm2137, %v2120, %v1077
  %v2186 = vsel %vm2137, %v2121, %v1079
  %v2187 = vsel %vm2137, %v2122, %v1081
  %v2188 = vsel %vm2137, %v2123, %v1083
  %v2189 = vsel %vm2137, %v2124, %v1085
  %v2190 = vsel %vm2137, %v2125, %v1087
  %v2191 = vsel %vm2137, %v2126, %v1089
  %v2192 = vsel %vm2137, %v2127, %v1091
  %v2193 = vsel %vm2137, %v2128, %v1093
  %v2194 = vsel %vm2137, %v2129, %v1095
  %v2195 = vsel %vm2137, %v2130, %v1097
  %v2196 = vsel %vm2137, %v2131, %v1099
  %v2197 = vsel %vm2137, %v2132, %v1101
  %v2198 = vsel %vm2137, %v2133, %v1103
  %v2199 = vsel %vm2137, %v2134, %v1105
  %v2200 = vsel %vm2137, %v2135, %v1107
  %v2201 = vsel %vm2137, %v2136, %v1109
  %vm2202 = vcmask 162816
  %v2203 = vsel %vm2202, %v2138, %v1175
  %v2204 = vsel %vm2202, %v2139, %v1177
  %v2205 = vsel %vm2202, %v2140, %v1179
  %v2206 = vsel %vm2202, %v2141, %v1181
  %v2207 = vsel %vm2202, %v2142, %v1183
  %v2208 = vsel %vm2202, %v2143, %v1185
  %v2209 = vsel %vm2202, %v2144, %v1187
  %v2210 = vsel %vm2202, %v2145, %v1189
  %v2211 = vsel %vm2202, %v2146, %v1191
  %v2212 = vsel %vm2202, %v2147, %v1193
  %v2213 = vsel %vm2202, %v2148, %v1195
  %v2214 = vsel %vm2202, %v2149, %v1197
  %v2215 = vsel %vm2202, %v2150, %v1199
  %v2216 = vsel %vm2202, %v2151, %v1201
  %v2217 = vsel %vm2202, %v2152, %v1203
  %v2218 = vsel %vm2202, %v2153, %v1205
  %v2219 = vsel %vm2202, %v2154, %v1207
  %v2220 = vsel %vm2202, %v2155, %v1209
  %v2221 = vsel %vm2202, %v2156, %v1211
  %v2222 = vsel %vm2202, %v2157, %v1213
  %v2223 = vsel %vm2202, %v2158, %v1215
  %v2224 = vsel %vm2202, %v2159, %v1217
  %v2225 = vsel %vm2202, %v2160, %v1219
  %v2226 = vsel %vm2202, %v2161, %v1221
  %v2227 = vsel %vm2202, %v2162, %v1223
  %v2228 = vsel %vm2202, %v2163, %v1225
  %v2229 = vsel %vm2202, %v2164, %v1227
  %v2230 = vsel %vm2202, %v2165, %v1229
  %v2231 = vsel %vm2202, %v2166, %v1231
  %v2232 = vsel %vm2202, %v2167, %v1233
  %v2233 = vsel %vm2202, %v2168, %v1235
  %v2234 = vsel %vm2202, %v2169, %v1237
  %v2235 = vsel %vm2202, %v2170, %v1239
  %v2236 = vsel %vm2202, %v2171, %v1241
  %v2237 = vsel %vm2202, %v2172, %v1243
  %v2238 = vsel %vm2202, %v2173, %v1245
  %v2239 = vsel %vm2202, %v2174, %v1247
  %v2240 = vsel %vm2202, %v2175, %v1249
  %v2241 = vsel %vm2202, %v2176, %v1251
  %v2242 = vsel %vm2202, %v2177, %v1253
  %v2243 = vsel %vm2202, %v2178, %v1255
  %v2244 = vsel %vm2202, %v2179, %v1257
  %v2245 = vsel %vm2202, %v2180, %v1259
  %v2246 = vsel %vm2202, %v2181, %v1261
  %v2247 = vsel %vm2202, %v2182, %v1263
  %v2248 = vsel %vm2202, %v2183, %v1265
  %v2249 = vsel %vm2202, %v2184, %v1267
  %v2250 = vsel %vm2202, %v2185, %v1269
  %v2251 = vsel %vm2202, %v2186, %v1271
  %v2252 = vsel %vm2202, %v2187, %v1273
  %v2253 = vsel %vm2202, %v2188, %v1275
  %v2254 = vsel %vm2202, %v2189, %v1277
  %v2255 = vsel %vm2202, %v2190, %v1279
  %v2256 = vsel %vm2202, %v2191, %v1281
  %v2257 = vsel %vm2202, %v2192, %v1283
  %v2258 = vsel %vm2202, %v2193, %v1285
  %v2259 = vsel %vm2202, %v2194, %v1287
  %v2260 = vsel %vm2202, %v2195, %v1289
  %v2261 = vsel %vm2202, %v2196, %v1291
  %v2262 = vsel %vm2202, %v2197, %v1293
  %v2263 = vsel %vm2202, %v2198, %v1295
  %v2264 = vsel %vm2202, %v2199, %v1297
  %v2265 = vsel %vm2202, %v2200, %v1299
  %v2266 = vsel %vm2202, %v2201, %v1301
  %vm2267 = vcmask 195584
  %v2268 = vsel %vm2267, %v2203, %v1367
  %v2269 = vsel %vm2267, %v2204, %v1369
  %v2270 = vsel %vm2267, %v2205, %v1371
  %v2271 = vsel %vm2267, %v2206, %v1373
  %v2272 = vsel %vm2267, %v2207, %v1375
  %v2273 = vsel %vm2267, %v2208, %v1377
  %v2274 = vsel %vm2267, %v2209, %v1379
  %v2275 = vsel %vm2267, %v2210, %v1381
  %v2276 = vsel %vm2267, %v2211, %v1383
  %v2277 = vsel %vm2267, %v2212, %v1385
  %v2278 = vsel %vm2267, %v2213, %v1387
  %v2279 = vsel %vm2267, %v2214, %v1389
  %v2280 = vsel %vm2267, %v2215, %v1391
  %v2281 = vsel %vm2267, %v2216, %v1393
  %v2282 = vsel %vm2267, %v2217, %v1395
  %v2283 = vsel %vm2267, %v2218, %v1397
  %v2284 = vsel %vm2267, %v2219, %v1399
  %v2285 = vsel %vm2267, %v2220, %v1401
  %v2286 = vsel %vm2267, %v2221, %v1403
  %v2287 = vsel %vm2267, %v2222, %v1405
  %v2288 = vsel %vm2267, %v2223, %v1407
  %v2289 = vsel %vm2267, %v2224, %v1409
  %v2290 = vsel %vm2267, %v2225, %v1411
  %v2291 = vsel %vm2267, %v2226, %v1413
  %v2292 = vsel %vm2267, %v2227, %v1415
  %v2293 = vsel %vm2267, %v2228, %v1417
  %v2294 = vsel %vm2267, %v2229, %v1419
  %v2295 = vsel %vm2267, %v2230, %v1421
  %v2296 = vsel %vm2267, %v2231, %v1423
  %v2297 = vsel %vm2267, %v2232, %v1425
  %v2298 = vsel %vm2267, %v2233, %v1427
  %v2299 = vsel %vm2267, %v2234, %v1429
  %v2300 = vsel %vm2267, %v2235, %v1431
  %v2301 = vsel %vm2267, %v2236, %v1433
  %v2302 = vsel %vm2267, %v2237, %v1435
  %v2303 = vsel %vm2267, %v2238, %v1437
  %v2304 = vsel %vm2267, %v2239, %v1439
  %v2305 = vsel %vm2267, %v2240, %v1441
  %v2306 = vsel %vm2267, %v2241, %v1443
  %v2307 = vsel %vm2267, %v2242, %v1445
  %v2308 = vsel %vm2267, %v2243, %v1447
  %v2309 = vsel %vm2267, %v2244, %v1449
  %v2310 = vsel %vm2267, %v2245, %v1451
  %v2311 = vsel %vm2267, %v2246, %v1453
  %v2312 = vsel %vm2267, %v2247, %v1455
  %v2313 = vsel %vm2267, %v2248, %v1457
  %v2314 = vsel %vm2267, %v2249, %v1459
  %v2315 = vsel %vm2267, %v2250, %v1461
  %v2316 = vsel %vm2267, %v2251, %v1463
  %v2317 = vsel %vm2267, %v2252, %v1465
  %v2318 = vsel %vm2267, %v2253, %v1467
  %v2319 = vsel %vm2267, %v2254, %v1469
  %v2320 = vsel %vm2267, %v2255, %v1471
  %v2321 = vsel %vm2267, %v2256, %v1473
  %v2322 = vsel %vm2267, %v2257, %v1475
  %v2323 = vsel %vm2267, %v2258, %v1477
  %v2324 = vsel %vm2267, %v2259, %v1479
  %v2325 = vsel %vm2267, %v2260, %v1481
  %v2326 = vsel %vm2267, %v2261, %v1483
  %v2327 = vsel %vm2267, %v2262, %v1485
  %v2328 = vsel %vm2267, %v2263, %v1487
  %v2329 = vsel %vm2267, %v2264, %v1489
  %v2330 = vsel %vm2267, %v2265, %v1491
  %v2331 = vsel %vm2267, %v2266, %v1493
  %vm2332 = vcmask 228352
  %v2333 = vsel %vm2332, %v2268, %v1559
  %v2334 = vsel %vm2332, %v2269, %v1561
  %v2335 = vsel %vm2332, %v2270, %v1563
  %v2336 = vsel %vm2332, %v2271, %v1565
  %v2337 = vsel %vm2332, %v2272, %v1567
  %v2338 = vsel %vm2332, %v2273, %v1569
  %v2339 = vsel %vm2332, %v2274, %v1571
  %v2340 = vsel %vm2332, %v2275, %v1573
  %v2341 = vsel %vm2332, %v2276, %v1575
  %v2342 = vsel %vm2332, %v2277, %v1577
  %v2343 = vsel %vm2332, %v2278, %v1579
  %v2344 = vsel %vm2332, %v2279, %v1581
  %v2345 = vsel %vm2332, %v2280, %v1583
  %v2346 = vsel %vm2332, %v2281, %v1585
  %v2347 = vsel %vm2332, %v2282, %v1587
  %v2348 = vsel %vm2332, %v2283, %v1589
  %v2349 = vsel %vm2332, %v2284, %v1591
  %v2350 = vsel %vm2332, %v2285, %v1593
  %v2351 = vsel %vm2332, %v2286, %v1595
  %v2352 = vsel %vm2332, %v2287, %v1597
  %v2353 = vsel %vm2332, %v2288, %v1599
  %v2354 = vsel %vm2332, %v2289, %v1601
  %v2355 = vsel %vm2332, %v2290, %v1603
  %v2356 = vsel %vm2332, %v2291, %v1605
  %v2357 = vsel %vm2332, %v2292, %v1607
  %v2358 = vsel %vm2332, %v2293, %v1609
  %v2359 = vsel %vm2332, %v2294, %v1611
  %v2360 = vsel %vm2332, %v2295, %v1613
  %v2361 = vsel %vm2332, %v2296, %v1615
  %v2362 = vsel %vm2332, %v2297, %v1617
  %v2363 = vsel %vm2332, %v2298, %v1619
  %v2364 = vsel %vm2332, %v2299, %v1621
  %v2365 = vsel %vm2332, %v2300, %v1623
  %v2366 = vsel %vm2332, %v2301, %v1625
  %v2367 = vsel %vm2332, %v2302, %v1627
  %v2368 = vsel %vm2332, %v2303, %v1629
  %v2369 = vsel %vm2332, %v2304, %v1631
  %v2370 = vsel %vm2332, %v2305, %v1633
  %v2371 = vsel %vm2332, %v2306, %v1635
  %v2372 = vsel %vm2332, %v2307, %v1637
  %v2373 = vsel %vm2332, %v2308, %v1639
  %v2374 = vsel %vm2332, %v2309, %v1641
  %v2375 = vsel %vm2332, %v2310, %v1643
  %v2376 = vsel %vm2332, %v2311, %v1645
  %v2377 = vsel %vm2332, %v2312, %v1647
  %v2378 = vsel %vm2332, %v2313, %v1649
  %v2379 = vsel %vm2332, %v2314, %v1651
  %v2380 = vsel %vm2332, %v2315, %v1653
  %v2381 = vsel %vm2332, %v2316, %v1655
  %v2382 = vsel %vm2332, %v2317, %v1657
  %v2383 = vsel %vm2332, %v2318, %v1659
  %v2384 = vsel %vm2332, %v2319, %v1661
  %v2385 = vsel %vm2332, %v2320, %v1663
  %v2386 = vsel %vm2332, %v2321, %v1665
  %v2387 = vsel %vm2332, %v2322, %v1667
  %v2388 = vsel %vm2332, %v2323, %v1669
  %v2389 = vsel %vm2332, %v2324, %v1671
  %v2390 = vsel %vm2332, %v2325, %v1673
  %v2391 = vsel %vm2332, %v2326, %v1675
  %v2392 = vsel %vm2332, %v2327, %v1677
  %v2393 = vsel %vm2332, %v2328, %v1679
  %v2394 = vsel %vm2332, %v2329, %v1681
  %v2395 = vsel %vm2332, %v2330, %v1683
  %v2396 = vsel %vm2332, %v2331, %v1685
  %vm2397 = vcmask 261120
  %v2398 = vsel %vm2397, %v2333, %v1751
  %v2399 = vsel %vm2397, %v2334, %v1753
  %v2400 = vsel %vm2397, %v2335, %v1755
  %v2401 = vsel %vm2397, %v2336, %v1757
  %v2402 = vsel %vm2397, %v2337, %v1759
  %v2403 = vsel %vm2397, %v2338, %v1761
  %v2404 = vsel %vm2397, %v2339, %v1763
  %v2405 = vsel %vm2397, %v2340, %v1765
  %v2406 = vsel %vm2397, %v2341, %v1767
  %v2407 = vsel %vm2397, %v2342, %v1769
  %v2408 = vsel %vm2397, %v2343, %v1771
  %v2409 = vsel %vm2397, %v2344, %v1773
  %v2410 = vsel %vm2397, %v2345, %v1775
  %v2411 = vsel %vm2397, %v2346, %v1777
  %v2412 = vsel %vm2397, %v2347, %v1779
  %v2413 = vsel %vm2397, %v2348, %v1781
  %v2414 = vsel %vm2397, %v2349, %v1783
  %v2415 = vsel %vm2397, %v2350, %v1785
  %v2416 = vsel %vm2397, %v2351, %v1787
  %v2417 = vsel %vm2397, %v2352, %v1789
  %v2418 = vsel %vm2397, %v2353, %v1791
  %v2419 = vsel %vm2397, %v2354, %v1793
  %v2420 = vsel %vm2397, %v2355, %v1795
  %v2421 = vsel %vm2397, %v2356, %v1797
  %v2422 = vsel %vm2397, %v2357, %v1799
  %v2423 = vsel %vm2397, %v2358, %v1801
  %v2424 = vsel %vm2397, %v2359, %v1803
  %v2425 = vsel %vm2397, %v2360, %v1805
  %v2426 = vsel %vm2397, %v2361, %v1807
  %v2427 = vsel %vm2397, %v2362, %v1809
  %v2428 = vsel %vm2397, %v2363, %v1811
  %v2429 = vsel %vm2397, %v2364, %v1813
  %v2430 = vsel %vm2397, %v2365, %v1815
  %v2431 = vsel %vm2397, %v2366, %v1817
  %v2432 = vsel %vm2397, %v2367, %v1819
  %v2433 = vsel %vm2397, %v2368, %v1821
  %v2434 = vsel %vm2397, %v2369, %v1823
  %v2435 = vsel %vm2397, %v2370, %v1825
  %v2436 = vsel %vm2397, %v2371, %v1827
  %v2437 = vsel %vm2397, %v2372, %v1829
  %v2438 = vsel %vm2397, %v2373, %v1831
  %v2439 = vsel %vm2397, %v2374, %v1833
  %v2440 = vsel %vm2397, %v2375, %v1835
  %v2441 = vsel %vm2397, %v2376, %v1837
  %v2442 = vsel %vm2397, %v2377, %v1839
  %v2443 = vsel %vm2397, %v2378, %v1841
  %v2444 = vsel %vm2397, %v2379, %v1843
  %v2445 = vsel %vm2397, %v2380, %v1845
  %v2446 = vsel %vm2397, %v2381, %v1847
  %v2447 = vsel %vm2397, %v2382, %v1849
  %v2448 = vsel %vm2397, %v2383, %v1851
  %v2449 = vsel %vm2397, %v2384, %v1853
  %v2450 = vsel %vm2397, %v2385, %v1855
  %v2451 = vsel %vm2397, %v2386, %v1857
  %v2452 = vsel %vm2397, %v2387, %v1859
  %v2453 = vsel %vm2397, %v2388, %v1861
  %v2454 = vsel %vm2397, %v2389, %v1863
  %v2455 = vsel %vm2397, %v2390, %v1865
  %v2456 = vsel %vm2397, %v2391, %v1867
  %v2457 = vsel %vm2397, %v2392, %v1869
  %v2458 = vsel %vm2397, %v2393, %v1871
  %v2459 = vsel %vm2397, %v2394, %v1873
  %v2460 = vsel %vm2397, %v2395, %v1875
  %v2461 = vsel %vm2397, %v2396, %v1877
  %v2462 = vld [vmem:[%s1] sm:$0xff]
  %v2463 = vld [vmem:[%s1 + $0x8] sm:$0xff]
  %v2464 = vld [vmem:[%s1 + $0x10] sm:$0xff]
  %v2465 = vld [vmem:[%s1 + $0x18] sm:$0xff]
  %v2466 = vld [vmem:[%s1 + $0x20] sm:$0xf]
  %v2467 = vld [vmem:[%s2] sm:$0x1]
  %v2469 = vperm.slane %v2467, 0
  %vm2471 = vcmask 293888
  %v2473 = vsel %vm2471, %v2398, 0
  %v2476 = vsel %vm2471, %v2399, 0
  %v2479 = vsel %vm2471, %v2400, 0
  %v2482 = vsel %vm2471, %v2401, 0
  %v2485 = vsel %vm2471, %v2402, 0
  %v2488 = vsel %vm2471, %v2403, 0
  %v2491 = vsel %vm2471, %v2404, 0
  %v2494 = vsel %vm2471, %v2405, 0
  %v2497 = vsel %vm2471, %v2406, 0
  %v2500 = vsel %vm2471, %v2407, 0
  %v2503 = vsel %vm2471, %v2408, 0
  %v2506 = vsel %vm2471, %v2409, 0
  %v2509 = vsel %vm2471, %v2410, 0
  %v2512 = vsel %vm2471, %v2411, 0
  %v2515 = vsel %vm2471, %v2412, 0
  %v2518 = vsel %vm2471, %v2413, 0
  %v2521 = vsel %vm2471, %v2414, 0
  %v2524 = vsel %vm2471, %v2415, 0
  %v2527 = vsel %vm2471, %v2416, 0
  %v2530 = vsel %vm2471, %v2417, 0
  %v2533 = vsel %vm2471, %v2418, 0
  %v2536 = vsel %vm2471, %v2419, 0
  %v2539 = vsel %vm2471, %v2420, 0
  %v2542 = vsel %vm2471, %v2421, 0
  %v2545 = vsel %vm2471, %v2422, 0
  %v2548 = vsel %vm2471, %v2423, 0
  %v2551 = vsel %vm2471, %v2424, 0
  %v2554 = vsel %vm2471, %v2425, 0
  %v2557 = vsel %vm2471, %v2426, 0
  %v2560 = vsel %vm2471, %v2427, 0
  %v2563 = vsel %vm2471, %v2428, 0
  %v2566 = vsel %vm2471, %v2429, 0
  %v2569 = vsel %vm2471, %v2430, 0
  %v2572 = vsel %vm2471, %v2431, 0
  %v2575 = vsel %vm2471, %v2432, 0
  %v2578 = vsel %vm2471, %v2433, 0
  %v2581 = vsel %vm2471, %v2434, 0
  %v2584 = vsel %vm2471, %v2435, 0
  %v2587 = vsel %vm2471, %v2436, 0
  %v2590 = vsel %vm2471, %v2437, 0
  %v2593 = vsel %vm2471, %v2438, 0
  %v2596 = vsel %vm2471, %v2439, 0
  %v2599 = vsel %vm2471, %v2440, 0
  %v2602 = vsel %vm2471, %v2441, 0
  %v2605 = vsel %vm2471, %v2442, 0
  %v2608 = vsel %vm2471, %v2443, 0
  %v2611 = vsel %vm2471, %v2444, 0
  %v2614 = vsel %vm2471, %v2445, 0
  %v2617 = vsel %vm2471, %v2446, 0
  %v2620 = vsel %vm2471, %v2447, 0
  %v2623 = vsel %vm2471, %v2448, 0
  %v2626 = vsel %vm2471, %v2449, 0
  %v2629 = vsel %vm2471, %v2450, 0
  %v2632 = vsel %vm2471, %v2451, 0
  %v2635 = vsel %vm2471, %v2452, 0
  %v2638 = vsel %vm2471, %v2453, 0
  %v2641 = vsel %vm2471, %v2454, 0
  %v2644 = vsel %vm2471, %v2455, 0
  %v2647 = vsel %vm2471, %v2456, 0
  %v2650 = vsel %vm2471, %v2457, 0
  %v2653 = vsel %vm2471, %v2458, 0
  %v2656 = vsel %vm2471, %v2459, 0
  %v2659 = vsel %vm2471, %v2460, 0
  %v2662 = vsel %vm2471, %v2461, 0
  %vm2664 = vcmask 1043456
  %v2666 = vsel %vm2664, %v2466, 0
  %2668 = vmatpush.msra.mxu0 0.0
  %2669 = vmatpush.msra.mxu0 0.0
  %2670 = vmatpush.msra.mxu0 0.0
  %2671 = vmatpush.msra.mxu0 0.0
  %2672 = vmatpush.msra.mxu0 0.0
  %2673 = vmatpush.msra.mxu0 0.0
  %2674 = vmatpush.msra.mxu0 0.0
  %2675 = vmatpush.msra.mxu0 0.0
  %2676 = vmatpush.msra.mxu0 0.0
  %2677 = vmatpush.msra.mxu0 0.0
  %2678 = vmatpush.msra.mxu0 0.0
  %2679 = vmatpush.msra.mxu0 %v2666
  %2680 = vmatpush.msra.mxu0 %v2465
  %2681 = vmatpush.msra.mxu0 %v2464
  %2682 = vmatpush.msra.mxu0 %v2463
  %2683 = vmatpush.msra.mxu0 %v2462
  %2684 = vmatmul.f32.gmra.mxu0 %v2473
  %v2685 = vpop.f32.mrf.mxu0
  %v2686 = vadd.f32 %v2469, %v2685
  %2687 = vmatmul.f32.gmra.mxu0 %v2476
  %v2688 = vpop.f32.mrf.mxu0
  %v2689 = vadd.f32 %v2469, %v2688
  %2690 = vmatmul.f32.gmra.mxu0 %v2479
  %v2691 = vpop.f32.mrf.mxu0
  %v2692 = vadd.f32 %v2469, %v2691
  %2693 = vmatmul.f32.gmra.mxu0 %v2482
  %v2694 = vpop.f32.mrf.mxu0
  %v2695 = vadd.f32 %v2469, %v2694
  %2696 = vmatmul.f32.gmra.mxu0 %v2485
  %v2697 = vpop.f32.mrf.mxu0
  %v2698 = vadd.f32 %v2469, %v2697
  %2699 = vmatmul.f32.gmra.mxu0 %v2488
  %v2700 = vpop.f32.mrf.mxu0
  %v2701 = vadd.f32 %v2469, %v2700
  %2702 = vmatmul.f32.gmra.mxu0 %v2491
  %v2703 = vpop.f32.mrf.mxu0
  %v2704 = vadd.f32 %v2469, %v2703
  %2705 = vmatmul.f32.gmra.mxu0 %v2494
  %v2706 = vpop.f32.mrf.mxu0
  %v2707 = vadd.f32 %v2469, %v2706
  %2708 = vmatmul.f32.gmra.mxu0 %v2497
  %v2709 = vpop.f32.mrf.mxu0
  %v2710 = vadd.f32 %v2469, %v2709
  %2711 = vmatmul.f32.gmra.mxu0 %v2500
  %v2712 = vpop.f32.mrf.mxu0
  %v2713 = vadd.f32 %v2469, %v2712
  %2714 = vmatmul.f32.gmra.mxu0 %v2503
  %v2715 = vpop.f32.mrf.mxu0
  %v2716 = vadd.f32 %v2469, %v2715
  %2717 = vmatmul.f32.gmra.mxu0 %v2506
  %v2718 = vpop.f32.mrf.mxu0
  %v2719 = vadd.f32 %v2469, %v2718
  %2720 = vmatmul.f32.gmra.mxu0 %v2509
  %v2721 = vpop.f32.mrf.mxu0
  %v2722 = vadd.f32 %v2469, %v2721
  %2723 = vmatmul.f32.gmra.mxu0 %v2512
  %v2724 = vpop.f32.mrf.mxu0
  %v2725 = vadd.f32 %v2469, %v2724
  %2726 = vmatmul.f32.gmra.mxu0 %v2515
  %v2727 = vpop.f32.mrf.mxu0
  %v2728 = vadd.f32 %v2469, %v2727
  %2729 = vmatmul.f32.gmra.mxu0 %v2518
  %v2730 = vpop.f32.mrf.mxu0
  %v2731 = vadd.f32 %v2469, %v2730
  %2732 = vmatmul.f32.gmra.mxu0 %v2521
  %v2733 = vpop.f32.mrf.mxu0
  %v2734 = vadd.f32 %v2469, %v2733
  %2735 = vmatmul.f32.gmra.mxu0 %v2524
  %v2736 = vpop.f32.mrf.mxu0
  %v2737 = vadd.f32 %v2469, %v2736
  %2738 = vmatmul.f32.gmra.mxu0 %v2527
  %v2739 = vpop.f32.mrf.mxu0
  %v2740 = vadd.f32 %v2469, %v2739
  %2741 = vmatmul.f32.gmra.mxu0 %v2530
  %v2742 = vpop.f32.mrf.mxu0
  %v2743 = vadd.f32 %v2469, %v2742
  %2744 = vmatmul.f32.gmra.mxu0 %v2533
  %v2745 = vpop.f32.mrf.mxu0
  %v2746 = vadd.f32 %v2469, %v2745
  %2747 = vmatmul.f32.gmra.mxu0 %v2536
  %v2748 = vpop.f32.mrf.mxu0
  %v2749 = vadd.f32 %v2469, %v2748
  %2750 = vmatmul.f32.gmra.mxu0 %v2539
  %v2751 = vpop.f32.mrf.mxu0
  %v2752 = vadd.f32 %v2469, %v2751
  %2753 = vmatmul.f32.gmra.mxu0 %v2542
  %v2754 = vpop.f32.mrf.mxu0
  %v2755 = vadd.f32 %v2469, %v2754
  %2756 = vmatmul.f32.gmra.mxu0 %v2545
  %v2757 = vpop.f32.mrf.mxu0
  %v2758 = vadd.f32 %v2469, %v2757
  %2759 = vmatmul.f32.gmra.mxu0 %v2548
  %v2760 = vpop.f32.mrf.mxu0
  %v2761 = vadd.f32 %v2469, %v2760
  %2762 = vmatmul.f32.gmra.mxu0 %v2551
  %v2763 = vpop.f32.mrf.mxu0
  %v2764 = vadd.f32 %v2469, %v2763
  %2765 = vmatmul.f32.gmra.mxu0 %v2554
  %v2766 = vpop.f32.mrf.mxu0
  %v2767 = vadd.f32 %v2469, %v2766
  %2768 = vmatmul.f32.gmra.mxu0 %v2557
  %v2769 = vpop.f32.mrf.mxu0
  %2770 = vmatmul.f32.gmra.mxu0 %v2560
  %v2771 = vpop.f32.mrf.mxu0
  %2772 = vmatmul.f32.gmra.mxu0 %v2563
  %v2773 = vpop.f32.mrf.mxu0
  %2774 = vmatmul.f32.gmra.mxu0 %v2566
  %v2775 = vpop.f32.mrf.mxu0
  %2776 = vmatmul.f32.gmra.mxu0 %v2569
  %v2777 = vpop.f32.mrf.mxu0
  %v2778 = vadd.f32 %v2469, %v2777
  %2779 = vmatmul.f32.gmra.mxu0 %v2572
  %v2780 = vpop.f32.mrf.mxu0
  %v2781 = vadd.f32 %v2469, %v2780
  %2782 = vmatmul.f32.gmra.mxu0 %v2575
  %v2783 = vpop.f32.mrf.mxu0
  %v2784 = vadd.f32 %v2469, %v2783
  %2785 = vmatmul.f32.gmra.mxu0 %v2578
  %v2786 = vpop.f32.mrf.mxu0
  %v2787 = vadd.f32 %v2469, %v2786
  %2788 = vmatmul.f32.gmra.mxu0 %v2581
  %v2789 = vpop.f32.mrf.mxu0
  %v2790 = vadd.f32 %v2469, %v2789
  %2791 = vmatmul.f32.gmra.mxu0 %v2584
  %v2792 = vpop.f32.mrf.mxu0
  %v2793 = vadd.f32 %v2469, %v2792
  %2794 = vmatmul.f32.gmra.mxu0 %v2587
  %v2795 = vpop.f32.mrf.mxu0
  %v2796 = vadd.f32 %v2469, %v2795
  %2797 = vmatmul.f32.gmra.mxu0 %v2590
  %v2798 = vpop.f32.mrf.mxu0
  %v2799 = vadd.f32 %v2469, %v2798
  %2800 = vmatmul.f32.gmra.mxu0 %v2593
  %v2801 = vpop.f32.mrf.mxu0
  %v2802 = vadd.f32 %v2469, %v2801
  %2803 = vmatmul.f32.gmra.mxu0 %v2596
  %v2804 = vpop.f32.mrf.mxu0
  %v2805 = vadd.f32 %v2469, %v2804
  %2806 = vmatmul.f32.gmra.mxu0 %v2599
  %v2807 = vpop.f32.mrf.mxu0
  %v2808 = vadd.f32 %v2469, %v2807
  %2809 = vmatmul.f32.gmra.mxu0 %v2602
  %v2810 = vpop.f32.mrf.mxu0
  %v2811 = vadd.f32 %v2469, %v2810
  %2812 = vmatmul.f32.gmra.mxu0 %v2605
  %v2813 = vpop.f32.mrf.mxu0
  %v2814 = vadd.f32 %v2469, %v2813
  %2815 = vmatmul.f32.gmra.mxu0 %v2608
  %v2816 = vpop.f32.mrf.mxu0
  %v2817 = vadd.f32 %v2469, %v2816
  %2818 = vmatmul.f32.gmra.mxu0 %v2611
  %v2819 = vpop.f32.mrf.mxu0
  %v2820 = vadd.f32 %v2469, %v2819
  %2821 = vmatmul.f32.gmra.mxu0 %v2614
  %v2822 = vpop.f32.mrf.mxu0
  %v2823 = vadd.f32 %v2469, %v2822
  %2824 = vmatmul.f32.gmra.mxu0 %v2617
  %v2825 = vpop.f32.mrf.mxu0
  %v2826 = vadd.f32 %v2469, %v2825
  %2827 = vmatmul.f32.gmra.mxu0 %v2620
  %v2828 = vpop.f32.mrf.mxu0
  %v2829 = vadd.f32 %v2469, %v2828
  %2830 = vmatmul.f32.gmra.mxu0 %v2623
  %v2831 = vpop.f32.mrf.mxu0
  %v2832 = vadd.f32 %v2469, %v2831
  %2833 = vmatmul.f32.gmra.mxu0 %v2626
  %v2834 = vpop.f32.mrf.mxu0
  %v2835 = vadd.f32 %v2469, %v2834
  %2836 = vmatmul.f32.gmra.mxu0 %v2629
  %v2837 = vpop.f32.mrf.mxu0
  %v2838 = vadd.f32 %v2469, %v2837
  %2839 = vmatmul.f32.gmra.mxu0 %v2632
  %v2840 = vpop.f32.mrf.mxu0
  %v2841 = vadd.f32 %v2469, %v2840
  %2842 = vmatmul.f32.gmra.mxu0 %v2635
  %v2843 = vpop.f32.mrf.mxu0
  %v2844 = vadd.f32 %v2469, %v2843
  %2845 = vmatmul.f32.gmra.mxu0 %v2638
  %v2846 = vpop.f32.mrf.mxu0
  %v2847 = vadd.f32 %v2469, %v2846
  %2848 = vmatmul.f32.gmra.mxu0 %v2641
  %v2849 = vpop.f32.mrf.mxu0
  %v2850 = vadd.f32 %v2469, %v2849
  %2851 = vmatmul.f32.gmra.mxu0 %v2644
  %v2852 = vpop.f32.mrf.mxu0
  %v2853 = vadd.f32 %v2469, %v2852
  %2854 = vmatmul.f32.gmra.mxu0 %v2647
  %v2855 = vpop.f32.mrf.mxu0
  %v2856 = vadd.f32 %v2469, %v2855
  %2857 = vmatmul.f32.gmra.mxu0 %v2650
  %v2858 = vpop.f32.mrf.mxu0
  %v2859 = vadd.f32 %v2469, %v2858
  %2860 = vmatmul.f32.gmra.mxu0 %v2653
  %v2861 = vpop.f32.mrf.mxu0
  %2862 = vmatmul.f32.gmra.mxu0 %v2656
  %v2863 = vpop.f32.mrf.mxu0
  %2864 = vmatmul.f32.gmra.mxu0 %v2659
  %v2865 = vpop.f32.mrf.mxu0
  %2866 = vmatmul.f32.gmra.mxu0 %v2662
  %v2867 = vpop.f32.mrf.mxu0
  %2868 = vdwg.mxu0
  %v2869 = vmax.f32 %v2686, %v2692
  %v2870 = vmax.f32 %v2689, %v2695
  %v2871 = vmax.f32 %v2698, %v2704
  %v2872 = vmax.f32 %v2701, %v2707
  %v2873 = vmax.f32 %v2710, %v2716
  %v2874 = vmax.f32 %v2713, %v2719
  %v2875 = vmax.f32 %v2722, %v2728
  %v2876 = vmax.f32 %v2725, %v2731
  %v2877 = vmax.f32 %v2734, %v2740
  %v2878 = vmax.f32 %v2737, %v2743
  %v2879 = vmax.f32 %v2746, %v2752
  %v2880 = vmax.f32 %v2749, %v2755
  %v2881 = vmax.f32 %v2758, %v2764
  %v2882 = vmax.f32 %v2761, %v2767
  %v2883 = vmax.f32 %v2778, %v2784
  %v2884 = vmax.f32 %v2781, %v2787
  %v2885 = vmax.f32 %v2790, %v2796
  %v2886 = vmax.f32 %v2793, %v2799
  %v2887 = vmax.f32 %v2802, %v2808
  %v2888 = vmax.f32 %v2805, %v2811
  %v2889 = vmax.f32 %v2814, %v2820
  %v2890 = vmax.f32 %v2817, %v2823
  %v2891 = vmax.f32 %v2826, %v2832
  %v2892 = vmax.f32 %v2829, %v2835
  %v2893 = vmax.f32 %v2838, %v2844
  %v2894 = vmax.f32 %v2841, %v2847
  %v2895 = vmax.f32 %v2850, %v2856
  %v2896 = vmax.f32 %v2853, %v2859
  %v2911 = vrot.slane %v2869, 1
  %v2912 = vrot.slane %v2871, 1
  %v2913 = vrot.slane %v2873, 1
  %v2914 = vrot.slane %v2875, 1
  %v2915 = vrot.slane %v2877, 1
  %v2916 = vrot.slane %v2879, 1
  %v2917 = vrot.slane %v2881, 1
  %v2918 = vrot.slane %v2883, 1
  %v2919 = vrot.slane %v2885, 1
  %v2920 = vrot.slane %v2887, 1
  %v2921 = vrot.slane %v2889, 1
  %v2922 = vrot.slane %v2891, 1
  %v2923 = vrot.slane %v2893, 1
  %v2924 = vrot.slane %v2895, 1
  %v2939 = vmax.f32 %v2869, %v2911
  %v2940 = vmax.f32 %v2871, %v2912
  %v2941 = vmax.f32 %v2873, %v2913
  %v2942 = vmax.f32 %v2875, %v2914
  %v2943 = vmax.f32 %v2877, %v2915
  %v2944 = vmax.f32 %v2879, %v2916
  %v2945 = vmax.f32 %v2881, %v2917
  %v2946 = vmax.f32 %v2883, %v2918
  %v2947 = vmax.f32 %v2885, %v2919
  %v2948 = vmax.f32 %v2887, %v2920
  %v2949 = vmax.f32 %v2889, %v2921
  %v2950 = vmax.f32 %v2891, %v2922
  %v2951 = vmax.f32 %v2893, %v2923
  %v2952 = vmax.f32 %v2895, %v2924
  %v2967 = vrot.slane %v2870, 1
  %v2968 = vrot.slane %v2872, 1
  %v2969 = vrot.slane %v2874, 1
  %v2970 = vrot.slane %v2876, 1
  %v2971 = vrot.slane %v2878, 1
  %v2972 = vrot.slane %v2880, 1
  %v2973 = vrot.slane %v2882, 1
  %v2974 = vrot.slane %v2884, 1
  %v2975 = vrot.slane %v2886, 1
  %v2976 = vrot.slane %v2888, 1
  %v2977 = vrot.slane %v2890, 1
  %v2978 = vrot.slane %v2892, 1
  %v2979 = vrot.slane %v2894, 1
  %v2980 = vrot.slane %v2896, 1
  %v2995 = vmax.f32 %v2870, %v2967
  %v2996 = vmax.f32 %v2872, %v2968
  %v2997 = vmax.f32 %v2874, %v2969
  %v2998 = vmax.f32 %v2876, %v2970
  %v2999 = vmax.f32 %v2878, %v2971
  %v3000 = vmax.f32 %v2880, %v2972
  %v3001 = vmax.f32 %v2882, %v2973
  %v3002 = vmax.f32 %v2884, %v2974
  %v3003 = vmax.f32 %v2886, %v2975
  %v3004 = vmax.f32 %v2888, %v2976
  %v3005 = vmax.f32 %v2890, %v2977
  %v3006 = vmax.f32 %v2892, %v2978
  %v3007 = vmax.f32 %v2894, %v2979
  %v3008 = vmax.f32 %v2896, %v2980
  %v3023 = vrot.slane %v2940, 7
  %vm3024 = vcmask 1041409
  %v3025 = vsel %vm3024, %v3023, %v2939
  %v3026 = vrot.slane %v2941, 6
  %vm3027 = vcmask 1042434
  %v3028 = vsel %vm3027, %v3026, %v3025
  %v3029 = vrot.slane %v2942, 5
  %vm3030 = vcmask 1043459
  %v3031 = vsel %vm3030, %v3029, %v3028
  %v3032 = vrot.slane %v2943, 4
  %vm3033 = vcmask 1044484
  %v3034 = vsel %vm3033, %v3032, %v3031
  %v3035 = vrot.slane %v2944, 3
  %vm3036 = vcmask 1045509
  %v3037 = vsel %vm3036, %v3035, %v3034
  %v3038 = vrot.slane %v2945, 2
  %vm3039 = vcmask 1046534
  %v3040 = vsel %vm3039, %v3038, %v3037
  %v3041 = vrot.slane %v2947, 7
  %v3042 = vsel %vm3024, %v3041, %v2946
  %v3043 = vrot.slane %v2948, 6
  %v3044 = vsel %vm3027, %v3043, %v3042
  %v3045 = vrot.slane %v2949, 5
  %v3046 = vsel %vm3030, %v3045, %v3044
  %v3047 = vrot.slane %v2950, 4
  %v3048 = vsel %vm3033, %v3047, %v3046
  %v3049 = vrot.slane %v2951, 3
  %v3050 = vsel %vm3036, %v3049, %v3048
  %v3051 = vrot.slane %v2952, 2
  %v3052 = vsel %vm3039, %v3051, %v3050
  %v3055 = vrot.slane %v2939, 2
  %v3056 = vrot.slane %v2940, 1
  %v3057 = vsel %vm3024, %v3056, %v3055
  %v3058 = vsel %vm3027, %v2941, %v3057
  %v3059 = vrot.slane %v2942, 7
  %v3060 = vsel %vm3030, %v3059, %v3058
  %v3061 = vrot.slane %v2943, 6
  %v3062 = vsel %vm3033, %v3061, %v3060
  %v3063 = vrot.slane %v2944, 5
  %v3064 = vsel %vm3036, %v3063, %v3062
  %v3065 = vrot.slane %v2945, 4
  %v3066 = vsel %vm3039, %v3065, %v3064
  %v3067 = vrot.slane %v2946, 2
  %v3068 = vrot.slane %v2947, 1
  %v3069 = vsel %vm3024, %v3068, %v3067
  %v3070 = vsel %vm3027, %v2948, %v3069
  %v3071 = vrot.slane %v2949, 7
  %v3072 = vsel %vm3030, %v3071, %v3070
  %v3073 = vrot.slane %v2950, 6
  %v3074 = vsel %vm3033, %v3073, %v3072
  %v3075 = vrot.slane %v2951, 5
  %v3076 = vsel %vm3036, %v3075, %v3074
  %v3077 = vrot.slane %v2952, 4
  %v3078 = vsel %vm3039, %v3077, %v3076
  %3079 = vrot.lane.b32.xlu0 %v3066, 8
  %v3080 = vpop.permute.xlu0 %3079
  %3081 = vrot.lane.b32.xlu0 %v3078, 8
  %v3082 = vpop.permute.xlu0 %3081
  %v3085 = vrot.slane %v2939, 4
  %v3086 = vrot.slane %v2940, 3
  %v3087 = vsel %vm3024, %v3086, %v3085
  %v3088 = vrot.slane %v2941, 2
  %v3089 = vsel %vm3027, %v3088, %v3087
  %v3090 = vrot.slane %v2942, 1
  %v3091 = vsel %vm3030, %v3090, %v3089
  %v3092 = vsel %vm3033, %v2943, %v3091
  %v3093 = vrot.slane %v2944, 7
  %v3094 = vsel %vm3036, %v3093, %v3092
  %v3095 = vrot.slane %v2945, 6
  %v3096 = vsel %vm3039, %v3095, %v3094
  %v3097 = vrot.slane %v2946, 4
  %v3098 = vrot.slane %v2947, 3
  %v3099 = vsel %vm3024, %v3098, %v3097
  %v3100 = vrot.slane %v2948, 2
  %v3101 = vsel %vm3027, %v3100, %v3099
  %v3102 = vrot.slane %v2949, 1
  %v3103 = vsel %vm3030, %v3102, %v3101
  %v3104 = vsel %vm3033, %v2950, %v3103
  %v3105 = vrot.slane %v2951, 7
  %v3106 = vsel %vm3036, %v3105, %v3104
  %v3107 = vrot.slane %v2952, 6
  %v3108 = vsel %vm3039, %v3107, %v3106
  %3109 = vrot.lane.b32.xlu0 %v3096, 16
  %v3110 = vpop.permute.xlu0 %3109
  %3111 = vrot.lane.b32.xlu0 %v3108, 16
  %v3112 = vpop.permute.xlu0 %3111
  %v3115 = vrot.slane %v2939, 6
  %v3116 = vrot.slane %v2940, 5
  %v3117 = vsel %vm3024, %v3116, %v3115
  %v3118 = vrot.slane %v2941, 4
  %v3119 = vsel %vm3027, %v3118, %v3117
  %v3120 = vrot.slane %v2942, 3
  %v3121 = vsel %vm3030, %v3120, %v3119
  %v3122 = vrot.slane %v2943, 2
  %v3123 = vsel %vm3033, %v3122, %v3121
  %v3124 = vrot.slane %v2944, 1
  %v3125 = vsel %vm3036, %v3124, %v3123
  %v3126 = vsel %vm3039, %v2945, %v3125
  %v3127 = vrot.slane %v2946, 6
  %v3128 = vrot.slane %v2947, 5
  %v3129 = vsel %vm3024, %v3128, %v3127
  %v3130 = vrot.slane %v2948, 4
  %v3131 = vsel %vm3027, %v3130, %v3129
  %v3132 = vrot.slane %v2949, 3
  %v3133 = vsel %vm3030, %v3132, %v3131
  %v3134 = vrot.slane %v2950, 2
  %v3135 = vsel %vm3033, %v3134, %v3133
  %v3136 = vrot.slane %v2951, 1
  %v3137 = vsel %vm3036, %v3136, %v3135
  %v3138 = vsel %vm3039, %v2952, %v3137
  %3139 = vrot.lane.b32.xlu0 %v3126, 24
  %v3140 = vpop.permute.xlu0 %3139
  %3141 = vrot.lane.b32.xlu0 %v3138, 24
  %v3142 = vpop.permute.xlu0 %3141
  %v3159 = vrot.slane %v2996, 7
  %v3160 = vsel %vm3024, %v3159, %v2995
  %v3161 = vrot.slane %v2997, 6
  %v3162 = vsel %vm3027, %v3161, %v3160
  %v3163 = vrot.slane %v2998, 5
  %v3164 = vsel %vm3030, %v3163, %v3162
  %v3165 = vrot.slane %v2999, 4
  %v3166 = vsel %vm3033, %v3165, %v3164
  %v3167 = vrot.slane %v3000, 3
  %v3168 = vsel %vm3036, %v3167, %v3166
  %v3169 = vrot.slane %v3001, 2
  %v3170 = vsel %vm3039, %v3169, %v3168
  %v3171 = vrot.slane %v3003, 7
  %v3172 = vsel %vm3024, %v3171, %v3002
  %v3173 = vrot.slane %v3004, 6
  %v3174 = vsel %vm3027, %v3173, %v3172
  %v3175 = vrot.slane %v3005, 5
  %v3176 = vsel %vm3030, %v3175, %v3174
  %v3177 = vrot.slane %v3006, 4
  %v3178 = vsel %vm3033, %v3177, %v3176
  %v3179 = vrot.slane %v3007, 3
  %v3180 = vsel %vm3036, %v3179, %v3178
  %v3181 = vrot.slane %v3008, 2
  %v3182 = vsel %vm3039, %v3181, %v3180
  %3183 = vrot.lane.b32.xlu0 %v3170, 32
  %v3184 = vpop.permute.xlu0 %3183
  %3185 = vrot.lane.b32.xlu0 %v3182, 32
  %v3186 = vpop.permute.xlu0 %3185
  %v3189 = vrot.slane %v2995, 2
  %v3190 = vrot.slane %v2996, 1
  %v3191 = vsel %vm3024, %v3190, %v3189
  %v3192 = vsel %vm3027, %v2997, %v3191
  %v3193 = vrot.slane %v2998, 7
  %v3194 = vsel %vm3030, %v3193, %v3192
  %v3195 = vrot.slane %v2999, 6
  %v3196 = vsel %vm3033, %v3195, %v3194
  %v3197 = vrot.slane %v3000, 5
  %v3198 = vsel %vm3036, %v3197, %v3196
  %v3199 = vrot.slane %v3001, 4
  %v3200 = vsel %vm3039, %v3199, %v3198
  %v3201 = vrot.slane %v3002, 2
  %v3202 = vrot.slane %v3003, 1
  %v3203 = vsel %vm3024, %v3202, %v3201
  %v3204 = vsel %vm3027, %v3004, %v3203
  %v3205 = vrot.slane %v3005, 7
  %v3206 = vsel %vm3030, %v3205, %v3204
  %v3207 = vrot.slane %v3006, 6
  %v3208 = vsel %vm3033, %v3207, %v3206
  %v3209 = vrot.slane %v3007, 5
  %v3210 = vsel %vm3036, %v3209, %v3208
  %v3211 = vrot.slane %v3008, 4
  %v3212 = vsel %vm3039, %v3211, %v3210
  %3213 = vrot.lane.b32.xlu0 %v3200, 40
  %v3214 = vpop.permute.xlu0 %3213
  %3215 = vrot.lane.b32.xlu0 %v3212, 40
  %v3216 = vpop.permute.xlu0 %3215
  %v3219 = vrot.slane %v2995, 4
  %v3220 = vrot.slane %v2996, 3
  %v3221 = vsel %vm3024, %v3220, %v3219
  %v3222 = vrot.slane %v2997, 2
  %v3223 = vsel %vm3027, %v3222, %v3221
  %v3224 = vrot.slane %v2998, 1
  %v3225 = vsel %vm3030, %v3224, %v3223
  %v3226 = vsel %vm3033, %v2999, %v3225
  %v3227 = vrot.slane %v3000, 7
  %v3228 = vsel %vm3036, %v3227, %v3226
  %v3229 = vrot.slane %v3001, 6
  %v3230 = vsel %vm3039, %v3229, %v3228
  %v3231 = vrot.slane %v3002, 4
  %v3232 = vrot.slane %v3003, 3
  %v3233 = vsel %vm3024, %v3232, %v3231
  %v3234 = vrot.slane %v3004, 2
  %v3235 = vsel %vm3027, %v3234, %v3233
  %v3236 = vrot.slane %v3005, 1
  %v3237 = vsel %vm3030, %v3236, %v3235
  %v3238 = vsel %vm3033, %v3006, %v3237
  %v3239 = vrot.slane %v3007, 7
  %v3240 = vsel %vm3036, %v3239, %v3238
  %v3241 = vrot.slane %v3008, 6
  %v3242 = vsel %vm3039, %v3241, %v3240
  %3243 = vrot.lane.b32.xlu0 %v3230, 48
  %v3244 = vpop.permute.xlu0 %3243
  %3245 = vrot.lane.b32.xlu0 %v3242, 48
  %v3246 = vpop.permute.xlu0 %3245
  %v3249 = vsel %vm2007, %v3040, %v3080
  %v3250 = vsel %vm2007, %v3052, %v3082
  %v3251 = vsel %vm2137, %v3249, %v3110
  %v3252 = vsel %vm2137, %v3250, %v3112
  %v3253 = vsel %vm2267, %v3251, %v3140
  %v3254 = vsel %vm2267, %v3252, %v3142
  %v3255 = vsel %vm2397, %v3253, %v3184
  %v3256 = vsel %vm2397, %v3254, %v3186
  %vm3257 = vcmask 326656
  %v3258 = vsel %vm3257, %v3255, %v3214
  %v3259 = vsel %vm3257, %v3256, %v3216
  %vm3260 = vcmask 392192
  %v3261 = vsel %vm3260, %v3258, %v3244
  %v3262 = vsel %vm3260, %v3259, %v3246
  %v3263 = vmax.f32 %v3261, 0.0
  %v3264 = vmax.f32 %v3262, 0.0
  %vm3265 = vcmask 456704
  %3266 = vst.msk [vmem:[%s3] sm:$0x7f] %vm3265, %v3263
  %3267 = vst.msk [vmem:[%s3 + $0x8] sm:$0x7f] %vm3265, %v3264
  // Predicated region
  $region14: #{block_forward.1} parent=0 // pred_check
    _
  $region15: #{block_forward.1} parent=0 // pred_check_branch
    %3269 = sbr.rel (0) target = $region17
  $region16: #{block_forward.1} parent=0 // pred_region
    _
  $region17: #{block_forward.1} parent=0 // pred_fallthru
    _
  // Predicated region
  $region18: #{block_forward.1} parent=0 // pred_check
    _
  $region19: #{block_forward.1} parent=0 // pred_check_branch
    %3271 = sbr.rel (0) target = $region21
  $region20: #{block_forward.1} parent=0 // pred_region
    _
  $region21: #{block_forward.1} parent=0 // pred_fallthru
    _

</llo_original>
